<compile_context>
chip_gen: v7x
topology: tpu7x:2x2x1
jax: 0.10.0
libtpu: 0.0.40
codegen_flags: <defaults>
</compile_context>

<pallas_src>
import functools

import jax
import jax.numpy as jnp
from jax import lax
from jax.experimental import pallas as pl
from jax.experimental.pallas import tpu as pltpu


# ----------------------------------------------------------------------------
# Fused MHA kernel: one grid step == one batch element.
# ----------------------------------------------------------------------------
def _fused_mha_kernel(q_in, k_in, v_in, m_in,
                      wq_ref, bq_ref, wk_ref, bk_ref, wv_ref, bv_ref,
                      wo_ref, bo_ref, o_ref, *, H):
    x_q = q_in[0]          # (Sq, Dq)
    x_k = k_in[0]          # (Sk, Dk)
    x_v = v_in[0]          # (Sk, Dv)
    mask = m_in[0]         # (1, Sk) -- broadcasts over query rows

    d_model = wq_ref.shape[1]
    d_k = d_model // H
    scale = 1.0 / (float(d_k) ** 0.5)

    # --- input projections (all operands resident in VMEM) ----------------
    # Fold the 1/sqrt(d_k) score scaling into q here (q is only used for the
    # score matmul), so the head loop carries no extra scaling work.
    q = (jnp.dot(x_q, wq_ref[...], preferred_element_type=jnp.float32)
         + bq_ref[...]) * scale
    k = jnp.dot(x_k, wk_ref[...], preferred_element_type=jnp.float32) + bk_ref[...]
    v = jnp.dot(x_v, wv_ref[...], preferred_element_type=jnp.float32) + bv_ref[...]

    # Additive key-padding mask, computed once and reused for every head.
    # PyTorch uses masked_fill(mask==0, -inf); a finite -1e30 keeps a fully
    # masked row NaN-free while contributing exactly 0 after softmax otherwise.
    mask_bias = jnp.where(mask == 0, jnp.float32(-1e30), jnp.float32(0.0))  # (1, Sk)

    # --- per-head attention (H is small & static -> fully unrolled) --------
    outs = []
    for h in range(H):
        sl = slice(h * d_k, (h + 1) * d_k)
        qh = q[:, sl]              # (Sq, d_k)
        kh = k[:, sl]              # (Sk, d_k)
        vh = v[:, sl]              # (Sk, d_k)

        # contract on the last axes directly (no explicit K transpose)
        s = lax.dot_general(qh, kh, (((1,), (1,)), ((), ())),
                            preferred_element_type=jnp.float32) + mask_bias  # (Sq, Sk)

        # numerically stable softmax along the key axis
        m_row = jnp.max(s, axis=-1, keepdims=True)        # XLU reduce
        p = jnp.exp(s - m_row)                            # EUP
        denom = jnp.sum(p, axis=-1, keepdims=True)        # XLU reduce
        p = p * pl.reciprocal(denom, approx=True)         # EUP slot, ~free

        outs.append(jnp.dot(p, vh, preferred_element_type=jnp.float32))   # (Sq, d_k)

    # heads concatenated on the lane axis -> lane-dense (Sq, d_model) slab,
    # so the output projection is one full-contraction MXU matmul.
    attn = jnp.concatenate(outs, axis=-1)

    # --- output projection --------------------------------------------------
    out = jnp.dot(attn, wo_ref[...], preferred_element_type=jnp.float32) + bo_ref[...]
    o_ref[0] = out.astype(o_ref.dtype)


# ----------------------------------------------------------------------------
# Wrapper: single pallas_call over a (B,) parallel grid.
# ----------------------------------------------------------------------------
def multiheaded_attention(Q, K, V, params, H, mask=None):
    """Q: (B,Sq,Dq), K: (B,Sk,Dk), V: (B,Sk,Dv), mask: (B,1,Sk) or None."""
    B, Sq, Dq = Q.shape
    _, Sk, Dk = K.shape
    Dv = V.shape[2]
    d_model = params["w_q"].shape[1]
    d_out = params["w_o"].shape[1]

    if mask is None:
        mask = jnp.ones((B, 1, Sk), jnp.float32)

    # biases as (1, Dout) rows so they broadcast over the sequence axis
    b_q = params["b_q"].reshape(1, d_model)
    b_k = params["b_k"].reshape(1, d_model)
    b_v = params["b_v"].reshape(1, d_model)
    b_o = params["b_o"].reshape(1, d_out)

    const2d = lambda b: (0, 0)   # weights / biases: same block every grid step

    kernel = functools.partial(_fused_mha_kernel, H=H)
    return pl.pallas_call(
        kernel,
        out_shape=jax.ShapeDtypeStruct((B, Sq, d_out), Q.dtype),
        grid=(B,),
        in_specs=[
            pl.BlockSpec((1, Sq, Dq), lambda b: (b, 0, 0)),
            pl.BlockSpec((1, Sk, Dk), lambda b: (b, 0, 0)),
            pl.BlockSpec((1, Sk, Dv), lambda b: (b, 0, 0)),
            pl.BlockSpec((1, 1, Sk), lambda b: (b, 0, 0)),
            pl.BlockSpec((Dq, d_model), const2d),
            pl.BlockSpec((1, d_model), const2d),
            pl.BlockSpec((Dk, d_model), const2d),
            pl.BlockSpec((1, d_model), const2d),
            pl.BlockSpec((Dv, d_model), const2d),
            pl.BlockSpec((1, d_model), const2d),
            pl.BlockSpec((d_model, d_out), const2d),
            pl.BlockSpec((1, d_out), const2d),
        ],
        out_specs=pl.BlockSpec((1, Sq, d_out), lambda b: (b, 0, 0)),
        compiler_params=pltpu.CompilerParams(
            dimension_semantics=("parallel",)),   # B>=2 -> both v7x TensorCores busy
    )(Q, K, V, mask, params["w_q"], b_q, params["w_k"], b_k,
      params["w_v"], b_v, params["w_o"], b_o)

    # TODO(synk): dropout (dout_p=0.0 in this config) is a no-op and omitted.
    # TODO(synk): the `visual` attention-matrix return path is not implemented.
    # TODO(synk): for production Sq/Sk (>=1k) switch the per-head score matmul
    # to flash-style Sk tiling (online softmax) to stay within v7x's 64 MiB VMEM.


# ----------------------------------------------------------------------------
# Pure-JAX reference (mirrors the PyTorch forward) for correctness checking.
# ----------------------------------------------------------------------------
def reference_mha(Q, K, V, params, H, mask=None):
    B, Sq, _ = Q.shape
    Sk = K.shape[1]
    d_model = params["w_q"].shape[1]
    d_k = d_model // H
    q = Q @ params["w_q"] + params["b_q"]
    k = K @ params["w_k"] + params["b_k"]
    v = V @ params["w_v"] + params["b_v"]
    qh = q.reshape(B, Sq, H, d_k).transpose(0, 2, 1, 3)
    kh = k.reshape(B, Sk, H, d_k).transpose(0, 2, 1, 3)
    vh = v.reshape(B, Sk, H, d_k).transpose(0, 2, 1, 3)
    s = jnp.einsum("bhqd,bhkd->bhqk", qh, kh) / jnp.sqrt(jnp.float32(d_k))
    if mask is not None:
        s = jnp.where(mask[:, None, :, :] == 0, -jnp.inf, s)
    p = jax.nn.softmax(s, axis=-1)
    o = jnp.einsum("bhqk,bhkd->bhqd", p, vh)
    o = o.transpose(0, 2, 1, 3).reshape(B, Sq, d_model)
    return o @ params["w_o"] + params["b_o"]


def init_params(key, d_model_Q, d_model_K, d_model_V, d_model, d_out):
    """Deterministic PyTorch-nn.Linear-style init, weights stored as (in, out)."""
    def lin(k, din, dout):
        k1, k2 = jax.random.split(k)
        bound = 1.0 / (din ** 0.5)
        w = jax.random.uniform(k1, (din, dout), jnp.float32, -bound, bound)
        b = jax.random.uniform(k2, (dout,), jnp.float32, -bound, bound)
        return w, b

    k0, k1, k2, k3 = jax.random.split(key, 4)
    w_q, b_q = lin(k0, d_model_Q, d_model)
    w_k, b_k = lin(k1, d_model_K, d_model)
    w_v, b_v = lin(k2, d_model_V, d_model)
    w_o, b_o = lin(k3, d_model, d_out)
    return dict(w_q=w_q, b_q=b_q, w_k=w_k, b_k=b_k,
                w_v=w_v, b_v=b_v, w_o=w_o, b_o=b_o)


if __name__ == "__main__":
    # Module config: d_model_Q=32, d_model_K=24, d_model_V=16, H=4
    # -> d_model=32, d_out=32, d_k=8
    B, Sq, Sk = 2, 8, 8
    d_model_Q, d_model_K, d_model_V, H = 32, 24, 16, 4
    d_model, d_out = d_model_Q, d_model_Q

    key = jax.random.PRNGKey(0)
    kq, kk, kv, km, kp = jax.random.split(key, 5)
    Q = jax.random.normal(kq, (B, Sq, d_model_Q), jnp.float32)
    K = jax.random.normal(kk, (B, Sk, d_model_K), jnp.float32)
    V = jax.random.normal(kv, (B, Sk, d_model_V), jnp.float32)
    # key-padding style mask (B, 1, Sk) with at least one valid key per row
    mask = (jax.random.uniform(km, (B, 1, Sk)) > 0.3).astype(jnp.float32)
    mask = mask.at[:, :, 0].set(1.0)

    params = init_params(kp, d_model_Q, d_model_K, d_model_V, d_model, d_out)

    out = multiheaded_attention(Q, K, V, params, H, mask)
    out = jax.block_until_ready(out)

    ref = reference_mha(Q, K, V, params, H, mask)
    assert out.shape == (B, Sq, d_out)
    assert jnp.allclose(out, ref, atol=1e-3, rtol=1e-3), \
        f"max abs err = {jnp.max(jnp.abs(out - ref))}"
    print("KERNEL_OK")
</pallas_src>

<mosaic_0001>
module attributes {stable_mosaic.version = 11 : i64} {
  func.func @_fused_mha_kernel(%arg0: i32, %arg1: memref<1x8x32xf32, #tpu.memory_space<vmem>>, %arg2: memref<1x8x24xf32, #tpu.memory_space<vmem>>, %arg3: memref<1x8x16xf32, #tpu.memory_space<vmem>>, %arg4: memref<1x1x8xf32, #tpu.memory_space<vmem>>, %arg5: memref<32x32xf32, #tpu.memory_space<vmem>>, %arg6: memref<1x32xf32, #tpu.memory_space<vmem>>, %arg7: memref<24x32xf32, #tpu.memory_space<vmem>>, %arg8: memref<1x32xf32, #tpu.memory_space<vmem>>, %arg9: memref<16x32xf32, #tpu.memory_space<vmem>>, %arg10: memref<1x32xf32, #tpu.memory_space<vmem>>, %arg11: memref<32x32xf32, #tpu.memory_space<vmem>>, %arg12: memref<1x32xf32, #tpu.memory_space<vmem>>, %arg13: memref<1x8x32xf32, #tpu.memory_space<vmem>>) attributes {dimension_semantics = [#tpu.dimension_semantics<parallel>], iteration_bounds = array<i64: 2>, scalar_prefetch = 0 : i64, scratch_operands = 0 : i64, tpu.core_type = #tpu.core_type<tc>, window_params = [{transform_indices = @transform_0, window_bounds = array<i64: 1, 8, 32>}, {transform_indices = @transform_1, window_bounds = array<i64: 1, 8, 24>}, {transform_indices = @transform_2, window_bounds = array<i64: 1, 8, 16>}, {transform_indices = @transform_3, window_bounds = array<i64: 1, 1, 8>}, {pipeline_mode = #tpu.pipeline_mode<synchronous>, transform_indices = @transform_4, window_bounds = array<i64: 32, 32>}, {pipeline_mode = #tpu.pipeline_mode<synchronous>, transform_indices = @transform_5, window_bounds = array<i64: 1, 32>}, {pipeline_mode = #tpu.pipeline_mode<synchronous>, transform_indices = @transform_6, window_bounds = array<i64: 24, 32>}, {pipeline_mode = #tpu.pipeline_mode<synchronous>, transform_indices = @transform_7, window_bounds = array<i64: 1, 32>}, {pipeline_mode = #tpu.pipeline_mode<synchronous>, transform_indices = @transform_8, window_bounds = array<i64: 16, 32>}, {pipeline_mode = #tpu.pipeline_mode<synchronous>, transform_indices = @transform_9, window_bounds = array<i64: 1, 32>}, {pipeline_mode = #tpu.pipeline_mode<synchronous>, transform_indices = @transform_10, window_bounds = array<i64: 32, 32>}, {pipeline_mode = #tpu.pipeline_mode<synchronous>, transform_indices = @transform_11, window_bounds = array<i64: 1, 32>}, {transform_indices = @transform_12, window_bounds = array<i64: 1, 8, 32>}]} {
    %c0 = arith.constant 0 : index
    %c0_0 = arith.constant 0 : index
    %c0_1 = arith.constant 0 : index
    %0 = vector.load %arg1[%c0, %c0_0, %c0_1] : memref<1x8x32xf32, #tpu.memory_space<vmem>>, vector<1x8x32xf32>
    %1 = vector.shape_cast %0 : vector<1x8x32xf32> to vector<8x32xf32>
    %c0_2 = arith.constant 0 : index
    %c0_3 = arith.constant 0 : index
    %c0_4 = arith.constant 0 : index
    %2 = vector.load %arg2[%c0_2, %c0_3, %c0_4] : memref<1x8x24xf32, #tpu.memory_space<vmem>>, vector<1x8x24xf32>
    %3 = vector.shape_cast %2 : vector<1x8x24xf32> to vector<8x24xf32>
    %c0_5 = arith.constant 0 : index
    %c0_6 = arith.constant 0 : index
    %c0_7 = arith.constant 0 : index
    %4 = vector.load %arg3[%c0_5, %c0_6, %c0_7] : memref<1x8x16xf32, #tpu.memory_space<vmem>>, vector<1x8x16xf32>
    %5 = vector.shape_cast %4 : vector<1x8x16xf32> to vector<8x16xf32>
    %c0_8 = arith.constant 0 : index
    %c0_9 = arith.constant 0 : index
    %c0_10 = arith.constant 0 : index
    %6 = vector.load %arg4[%c0_8, %c0_9, %c0_10] : memref<1x1x8xf32, #tpu.memory_space<vmem>>, vector<1x1x8xf32>
    %7 = vector.shape_cast %6 : vector<1x1x8xf32> to vector<1x8xf32>
    %c0_11 = arith.constant 0 : index
    %c0_12 = arith.constant 0 : index
    %8 = vector.load %arg5[%c0_11, %c0_12] : memref<32x32xf32, #tpu.memory_space<vmem>>, vector<32x32xf32>
    %cst = arith.constant dense<0.000000e+00> : vector<8x32xf32>
    %9 = tpu.matmul %1, %8, %cst {dimension_numbers = #tpu.dot_dimension_numbers<[1], [0], [0], [1], [0, 0, 1, 1], [], []>} : vector<8x32xf32>, vector<32x32xf32>, vector<8x32xf32> -> vector<8x32xf32>
    %c0_13 = arith.constant 0 : index
    %c0_14 = arith.constant 0 : index
    %10 = vector.load %arg6[%c0_13, %c0_14] : memref<1x32xf32, #tpu.memory_space<vmem>>, vector<1x32xf32>
    %11 = vector.broadcast %10 : vector<1x32xf32> to vector<8x32xf32>
    %12 = arith.addf %9, %11 : vector<8x32xf32>
    %cst_15 = arith.constant 0.353553385 : f32
    %13 = vector.broadcast %cst_15 : f32 to vector<8x32xf32>
    %14 = arith.mulf %12, %13 : vector<8x32xf32>
    %c0_16 = arith.constant 0 : index
    %c0_17 = arith.constant 0 : index
    %15 = vector.load %arg7[%c0_16, %c0_17] : memref<24x32xf32, #tpu.memory_space<vmem>>, vector<24x32xf32>
    %cst_18 = arith.constant dense<0.000000e+00> : vector<8x32xf32>
    %16 = tpu.matmul %3, %15, %cst_18 {dimension_numbers = #tpu.dot_dimension_numbers<[1], [0], [0], [1], [0, 0, 1, 1], [], []>} : vector<8x24xf32>, vector<24x32xf32>, vector<8x32xf32> -> vector<8x32xf32>
    %c0_19 = arith.constant 0 : index
    %c0_20 = arith.constant 0 : index
    %17 = vector.load %arg8[%c0_19, %c0_20] : memref<1x32xf32, #tpu.memory_space<vmem>>, vector<1x32xf32>
    %18 = vector.broadcast %17 : vector<1x32xf32> to vector<8x32xf32>
    %19 = arith.addf %16, %18 : vector<8x32xf32>
    %c0_21 = arith.constant 0 : index
    %c0_22 = arith.constant 0 : index
    %20 = vector.load %arg9[%c0_21, %c0_22] : memref<16x32xf32, #tpu.memory_space<vmem>>, vector<16x32xf32>
    %cst_23 = arith.constant dense<0.000000e+00> : vector<8x32xf32>
    %21 = tpu.matmul %5, %20, %cst_23 {dimension_numbers = #tpu.dot_dimension_numbers<[1], [0], [0], [1], [0, 0, 1, 1], [], []>} : vector<8x16xf32>, vector<16x32xf32>, vector<8x32xf32> -> vector<8x32xf32>
    %c0_24 = arith.constant 0 : index
    %c0_25 = arith.constant 0 : index
    %22 = vector.load %arg10[%c0_24, %c0_25] : memref<1x32xf32, #tpu.memory_space<vmem>>, vector<1x32xf32>
    %23 = vector.broadcast %22 : vector<1x32xf32> to vector<8x32xf32>
    %24 = arith.addf %21, %23 : vector<8x32xf32>
    %cst_26 = arith.constant 0.000000e+00 : f32
    %25 = vector.broadcast %cst_26 : f32 to vector<1x8xf32>
    %26 = arith.cmpf oeq, %7, %25 : vector<1x8xf32>
    %cst_27 = arith.constant -1.000000e+30 : f32
    %cst_28 = arith.constant 0.000000e+00 : f32
    %27 = vector.broadcast %cst_27 : f32 to vector<1x8xf32>
    %28 = vector.broadcast %cst_28 : f32 to vector<1x8xf32>
    %29 = arith.select %26, %27, %28 : vector<1x8xi1>, vector<1x8xf32>
    %30 = vector.extract_strided_slice %14 {offsets = [0, 0], sizes = [8, 8], strides = [1, 1]} : vector<8x32xf32> to vector<8x8xf32>
    %31 = vector.extract_strided_slice %19 {offsets = [0, 0], sizes = [8, 8], strides = [1, 1]} : vector<8x32xf32> to vector<8x8xf32>
    %32 = vector.extract_strided_slice %24 {offsets = [0, 0], sizes = [8, 8], strides = [1, 1]} : vector<8x32xf32> to vector<8x8xf32>
    %cst_29 = arith.constant dense<0.000000e+00> : vector<8x8xf32>
    %33 = tpu.matmul %30, %31, %cst_29 {dimension_numbers = #tpu.dot_dimension_numbers<[1], [1], [0], [0], [0, 0, 1, 0], [], []>} : vector<8x8xf32>, vector<8x8xf32>, vector<8x8xf32> -> vector<8x8xf32>
    %34 = vector.broadcast %29 : vector<1x8xf32> to vector<8x8xf32>
    %35 = arith.addf %33, %34 : vector<8x8xf32>
    %cst_30 = arith.constant dense<0xFF800000> : vector<8xf32>
    %36 = vector.multi_reduction <maximumf>, %35, %cst_30 [1] : vector<8x8xf32> to vector<8xf32>
    %37 = vector.shape_cast %36 : vector<8xf32> to vector<8x1xf32>
    %38 = vector.broadcast %37 : vector<8x1xf32> to vector<8x8xf32>
    %39 = arith.subf %35, %38 : vector<8x8xf32>
    %40 = math.exp %39 : vector<8x8xf32>
    %cst_31 = arith.constant dense<0.000000e+00> : vector<8xf32>
    %41 = vector.multi_reduction <add>, %40, %cst_31 [1] : vector<8x8xf32> to vector<8xf32>
    %42 = vector.shape_cast %41 : vector<8xf32> to vector<8x1xf32>
    %43 = tpu.reciprocal %42 {approx = true} : vector<8x1xf32> -> vector<8x1xf32>
    %44 = vector.broadcast %43 : vector<8x1xf32> to vector<8x8xf32>
    %45 = arith.mulf %40, %44 : vector<8x8xf32>
    %cst_32 = arith.constant dense<0.000000e+00> : vector<8x8xf32>
    %46 = tpu.matmul %45, %32, %cst_32 {dimension_numbers = #tpu.dot_dimension_numbers<[1], [0], [0], [1], [0, 0, 1, 1], [], []>} : vector<8x8xf32>, vector<8x8xf32>, vector<8x8xf32> -> vector<8x8xf32>
    %47 = vector.extract_strided_slice %14 {offsets = [0, 8], sizes = [8, 8], strides = [1, 1]} : vector<8x32xf32> to vector<8x8xf32>
    %48 = vector.extract_strided_slice %19 {offsets = [0, 8], sizes = [8, 8], strides = [1, 1]} : vector<8x32xf32> to vector<8x8xf32>
    %49 = vector.extract_strided_slice %24 {offsets = [0, 8], sizes = [8, 8], strides = [1, 1]} : vector<8x32xf32> to vector<8x8xf32>
    %cst_33 = arith.constant dense<0.000000e+00> : vector<8x8xf32>
    %50 = tpu.matmul %47, %48, %cst_33 {dimension_numbers = #tpu.dot_dimension_numbers<[1], [1], [0], [0], [0, 0, 1, 0], [], []>} : vector<8x8xf32>, vector<8x8xf32>, vector<8x8xf32> -> vector<8x8xf32>
    %51 = vector.broadcast %29 : vector<1x8xf32> to vector<8x8xf32>
    %52 = arith.addf %50, %51 : vector<8x8xf32>
    %cst_34 = arith.constant dense<0xFF800000> : vector<8xf32>
    %53 = vector.multi_reduction <maximumf>, %52, %cst_34 [1] : vector<8x8xf32> to vector<8xf32>
    %54 = vector.shape_cast %53 : vector<8xf32> to vector<8x1xf32>
    %55 = vector.broadcast %54 : vector<8x1xf32> to vector<8x8xf32>
    %56 = arith.subf %52, %55 : vector<8x8xf32>
    %57 = math.exp %56 : vector<8x8xf32>
    %cst_35 = arith.constant dense<0.000000e+00> : vector<8xf32>
    %58 = vector.multi_reduction <add>, %57, %cst_35 [1] : vector<8x8xf32> to vector<8xf32>
    %59 = vector.shape_cast %58 : vector<8xf32> to vector<8x1xf32>
    %60 = tpu.reciprocal %59 {approx = true} : vector<8x1xf32> -> vector<8x1xf32>
    %61 = vector.broadcast %60 : vector<8x1xf32> to vector<8x8xf32>
    %62 = arith.mulf %57, %61 : vector<8x8xf32>
    %cst_36 = arith.constant dense<0.000000e+00> : vector<8x8xf32>
    %63 = tpu.matmul %62, %49, %cst_36 {dimension_numbers = #tpu.dot_dimension_numbers<[1], [0], [0], [1], [0, 0, 1, 1], [], []>} : vector<8x8xf32>, vector<8x8xf32>, vector<8x8xf32> -> vector<8x8xf32>
    %64 = vector.extract_strided_slice %14 {offsets = [0, 16], sizes = [8, 8], strides = [1, 1]} : vector<8x32xf32> to vector<8x8xf32>
    %65 = vector.extract_strided_slice %19 {offsets = [0, 16], sizes = [8, 8], strides = [1, 1]} : vector<8x32xf32> to vector<8x8xf32>
    %66 = vector.extract_strided_slice %24 {offsets = [0, 16], sizes = [8, 8], strides = [1, 1]} : vector<8x32xf32> to vector<8x8xf32>
    %cst_37 = arith.constant dense<0.000000e+00> : vector<8x8xf32>
    %67 = tpu.matmul %64, %65, %cst_37 {dimension_numbers = #tpu.dot_dimension_numbers<[1], [1], [0], [0], [0, 0, 1, 0], [], []>} : vector<8x8xf32>, vector<8x8xf32>, vector<8x8xf32> -> vector<8x8xf32>
    %68 = vector.broadcast %29 : vector<1x8xf32> to vector<8x8xf32>
    %69 = arith.addf %67, %68 : vector<8x8xf32>
    %cst_38 = arith.constant dense<0xFF800000> : vector<8xf32>
    %70 = vector.multi_reduction <maximumf>, %69, %cst_38 [1] : vector<8x8xf32> to vector<8xf32>
    %71 = vector.shape_cast %70 : vector<8xf32> to vector<8x1xf32>
    %72 = vector.broadcast %71 : vector<8x1xf32> to vector<8x8xf32>
    %73 = arith.subf %69, %72 : vector<8x8xf32>
    %74 = math.exp %73 : vector<8x8xf32>
    %cst_39 = arith.constant dense<0.000000e+00> : vector<8xf32>
    %75 = vector.multi_reduction <add>, %74, %cst_39 [1] : vector<8x8xf32> to vector<8xf32>
    %76 = vector.shape_cast %75 : vector<8xf32> to vector<8x1xf32>
    %77 = tpu.reciprocal %76 {approx = true} : vector<8x1xf32> -> vector<8x1xf32>
    %78 = vector.broadcast %77 : vector<8x1xf32> to vector<8x8xf32>
    %79 = arith.mulf %74, %78 : vector<8x8xf32>
    %cst_40 = arith.constant dense<0.000000e+00> : vector<8x8xf32>
    %80 = tpu.matmul %79, %66, %cst_40 {dimension_numbers = #tpu.dot_dimension_numbers<[1], [0], [0], [1], [0, 0, 1, 1], [], []>} : vector<8x8xf32>, vector<8x8xf32>, vector<8x8xf32> -> vector<8x8xf32>
    %81 = vector.extract_strided_slice %14 {offsets = [0, 24], sizes = [8, 8], strides = [1, 1]} : vector<8x32xf32> to vector<8x8xf32>
    %82 = vector.extract_strided_slice %19 {offsets = [0, 24], sizes = [8, 8], strides = [1, 1]} : vector<8x32xf32> to vector<8x8xf32>
    %83 = vector.extract_strided_slice %24 {offsets = [0, 24], sizes = [8, 8], strides = [1, 1]} : vector<8x32xf32> to vector<8x8xf32>
    %cst_41 = arith.constant dense<0.000000e+00> : vector<8x8xf32>
    %84 = tpu.matmul %81, %82, %cst_41 {dimension_numbers = #tpu.dot_dimension_numbers<[1], [1], [0], [0], [0, 0, 1, 0], [], []>} : vector<8x8xf32>, vector<8x8xf32>, vector<8x8xf32> -> vector<8x8xf32>
    %85 = vector.broadcast %29 : vector<1x8xf32> to vector<8x8xf32>
    %86 = arith.addf %84, %85 : vector<8x8xf32>
    %cst_42 = arith.constant dense<0xFF800000> : vector<8xf32>
    %87 = vector.multi_reduction <maximumf>, %86, %cst_42 [1] : vector<8x8xf32> to vector<8xf32>
    %88 = vector.shape_cast %87 : vector<8xf32> to vector<8x1xf32>
    %89 = vector.broadcast %88 : vector<8x1xf32> to vector<8x8xf32>
    %90 = arith.subf %86, %89 : vector<8x8xf32>
    %91 = math.exp %90 : vector<8x8xf32>
    %cst_43 = arith.constant dense<0.000000e+00> : vector<8xf32>
    %92 = vector.multi_reduction <add>, %91, %cst_43 [1] : vector<8x8xf32> to vector<8xf32>
    %93 = vector.shape_cast %92 : vector<8xf32> to vector<8x1xf32>
    %94 = tpu.reciprocal %93 {approx = true} : vector<8x1xf32> -> vector<8x1xf32>
    %95 = vector.broadcast %94 : vector<8x1xf32> to vector<8x8xf32>
    %96 = arith.mulf %91, %95 : vector<8x8xf32>
    %cst_44 = arith.constant dense<0.000000e+00> : vector<8x8xf32>
    %97 = tpu.matmul %96, %83, %cst_44 {dimension_numbers = #tpu.dot_dimension_numbers<[1], [0], [0], [1], [0, 0, 1, 1], [], []>} : vector<8x8xf32>, vector<8x8xf32>, vector<8x8xf32> -> vector<8x8xf32>
    %98 = tpu.concatenate %46, %63, %80, %97 in 1 : vector<8x8xf32>, vector<8x8xf32>, vector<8x8xf32>, vector<8x8xf32> -> vector<8x32xf32>
    %c0_45 = arith.constant 0 : index
    %c0_46 = arith.constant 0 : index
    %99 = vector.load %arg11[%c0_45, %c0_46] : memref<32x32xf32, #tpu.memory_space<vmem>>, vector<32x32xf32>
    %cst_47 = arith.constant dense<0.000000e+00> : vector<8x32xf32>
    %100 = tpu.matmul %98, %99, %cst_47 {dimension_numbers = #tpu.dot_dimension_numbers<[1], [0], [0], [1], [0, 0, 1, 1], [], []>} : vector<8x32xf32>, vector<32x32xf32>, vector<8x32xf32> -> vector<8x32xf32>
    %c0_48 = arith.constant 0 : index
    %c0_49 = arith.constant 0 : index
    %101 = vector.load %arg12[%c0_48, %c0_49] : memref<1x32xf32, #tpu.memory_space<vmem>>, vector<1x32xf32>
    %102 = vector.broadcast %101 : vector<1x32xf32> to vector<8x32xf32>
    %103 = arith.addf %100, %102 : vector<8x32xf32>
    %c0_50 = arith.constant 0 : index
    %c0_51 = arith.constant 0 : index
    %c0_52 = arith.constant 0 : index
    %104 = vector.load %arg13[%c0_50, %c0_51, %c0_52] : memref<1x8x32xf32, #tpu.memory_space<vmem>>, vector<1x8x32xf32>
    %105 = vector.shape_cast %104 : vector<1x8x32xf32> to vector<8x32xf32>
    %106 = vector.shape_cast %103 : vector<8x32xf32> to vector<1x8x32xf32>
    tpu.vector_store %arg13[%c0_50, %c0_51, %c0_52], %106 {strides = array<i32>} : memref<1x8x32xf32, #tpu.memory_space<vmem>>, vector<1x8x32xf32>,
    return
  }
  func.func @transform_0(%arg0: i32) -> (i32, i32, i32) {
    %c0_i32 = arith.constant 0 : i32
    %c0_i32_0 = arith.constant 0 : i32
    %c0_i32_1 = arith.constant 0 : i32
    return %arg0, %c0_i32, %c0_i32_0 : i32, i32, i32
  }
  func.func @transform_1(%arg0: i32) -> (i32, i32, i32) {
    %c0_i32 = arith.constant 0 : i32
    %c0_i32_0 = arith.constant 0 : i32
    %c0_i32_1 = arith.constant 0 : i32
    return %arg0, %c0_i32, %c0_i32_0 : i32, i32, i32
  }
  func.func @transform_2(%arg0: i32) -> (i32, i32, i32) {
    %c0_i32 = arith.constant 0 : i32
    %c0_i32_0 = arith.constant 0 : i32
    %c0_i32_1 = arith.constant 0 : i32
    return %arg0, %c0_i32, %c0_i32_0 : i32, i32, i32
  }
  func.func @transform_3(%arg0: i32) -> (i32, i32, i32) {
    %c0_i32 = arith.constant 0 : i32
    %c0_i32_0 = arith.constant 0 : i32
    %c0_i32_1 = arith.constant 0 : i32
    return %arg0, %c0_i32, %c0_i32_0 : i32, i32, i32
  }
  func.func @transform_4(%arg0: i32) -> (i32, i32) {
    %c0_i32 = arith.constant 0 : i32
    %c0_i32_0 = arith.constant 0 : i32
    %c0_i32_1 = arith.constant 0 : i32
    return %c0_i32, %c0_i32_0 : i32, i32
  }
  func.func @transform_5(%arg0: i32) -> (i32, i32) {
    %c0_i32 = arith.constant 0 : i32
    %c0_i32_0 = arith.constant 0 : i32
    %c0_i32_1 = arith.constant 0 : i32
    return %c0_i32, %c0_i32_0 : i32, i32
  }
  func.func @transform_6(%arg0: i32) -> (i32, i32) {
    %c0_i32 = arith.constant 0 : i32
    %c0_i32_0 = arith.constant 0 : i32
    %c0_i32_1 = arith.constant 0 : i32
    return %c0_i32, %c0_i32_0 : i32, i32
  }
  func.func @transform_7(%arg0: i32) -> (i32, i32) {
    %c0_i32 = arith.constant 0 : i32
    %c0_i32_0 = arith.constant 0 : i32
    %c0_i32_1 = arith.constant 0 : i32
    return %c0_i32, %c0_i32_0 : i32, i32
  }
  func.func @transform_8(%arg0: i32) -> (i32, i32) {
    %c0_i32 = arith.constant 0 : i32
    %c0_i32_0 = arith.constant 0 : i32
    %c0_i32_1 = arith.constant 0 : i32
    return %c0_i32, %c0_i32_0 : i32, i32
  }
  func.func @transform_9(%arg0: i32) -> (i32, i32) {
    %c0_i32 = arith.constant 0 : i32
    %c0_i32_0 = arith.constant 0 : i32
    %c0_i32_1 = arith.constant 0 : i32
    return %c0_i32, %c0_i32_0 : i32, i32
  }
  func.func @transform_10(%arg0: i32) -> (i32, i32) {
    %c0_i32 = arith.constant 0 : i32
    %c0_i32_0 = arith.constant 0 : i32
    %c0_i32_1 = arith.constant 0 : i32
    return %c0_i32, %c0_i32_0 : i32, i32
  }
  func.func @transform_11(%arg0: i32) -> (i32, i32) {
    %c0_i32 = arith.constant 0 : i32
    %c0_i32_0 = arith.constant 0 : i32
    %c0_i32_1 = arith.constant 0 : i32
    return %c0_i32, %c0_i32_0 : i32, i32
  }
  func.func @transform_12(%arg0: i32) -> (i32, i32, i32) {
    %c0_i32 = arith.constant 0 : i32
    %c0_i32_0 = arith.constant 0 : i32
    %c0_i32_1 = arith.constant 0 : i32
    return %arg0, %c0_i32, %c0_i32_0 : i32, i32, i32
  }
}

</mosaic_0001>

<llo_original>
// kernel: tpu_custom_call.1
$region0: #{tpu_custom_call.1}
  #allocation0 [shape = 'u32[]', space=smem, size = 0x4, offset = 0x4, fixed_abs, tag = 'smem constant byte address 0x4 - core index']
  #allocation1 [shape = 'u32[144,128]{1,0:T(1,128)}', space=vmem, size = 0x12000, scoped, tag = 'internal scratch']
  %s0 = inlined_call_operand.hbm [shape: f32[2,8,32], index: 0, kind: input, shape index: {}]
  %s1 = inlined_call_operand.hbm [shape: f32[2,8,24], index: 1, kind: input, shape index: {}]
  %s2 = inlined_call_operand.hbm [shape: f32[2,8,16], index: 2, kind: input, shape index: {}]
  %s3 = inlined_call_operand.vmem [shape: f32[2,1,8], index: 3, kind: input, shape index: {}]
  %s4 = inlined_call_operand.hbm [shape: f32[32,32], index: 4, kind: input, shape index: {}]
  %s5 = inlined_call_operand.vmem [shape: f32[1,32], index: 5, kind: input, shape index: {}]
  %s6 = inlined_call_operand.hbm [shape: f32[24,32], index: 6, kind: input, shape index: {}]
  %s7 = inlined_call_operand.vmem [shape: f32[1,32], index: 7, kind: input, shape index: {}]
  %s8 = inlined_call_operand.hbm [shape: f32[16,32], index: 8, kind: input, shape index: {}]
  %s9 = inlined_call_operand.vmem [shape: f32[1,32], index: 9, kind: input, shape index: {}]
  %s10 = inlined_call_operand.vmem [shape: f32[32,32], index: 10, kind: input, shape index: {}]
  %s11 = inlined_call_operand.vmem [shape: f32[1,32], index: 11, kind: input, shape index: {}]
  %s12 = inlined_call_operand.hbm [shape: f32[2,8,32], index: 12, kind: output, shape index: {}]
  %s13 = sld [smem:[#allocation0]]
  $region105: #{tpu_custom_call.1} parent=0
    _
  %s15 = ssub.s32 1, %s13
  %s16 = scalar_select 0, %s15, %s13
  $region1: #{tpu_custom_call.1} parent=0
    #allocation2 [shape = 'u8[8192]{0}', space=vmem, size = 0x2000, scoped, tag = 'input window, operand 0']
    #allocation3 [shape = 's32[2]{0}', space=sflag, size = 0x8, scoped, tag = 'scoped memory for tpu_custom_call.1']
    #allocation4 [shape = 's32[2]{0}', space=sflag, size = 0x8, scoped, tag = 'scoped memory for tpu_custom_call.1']
    #allocation5 [shape = 'u8[8192]{0}', space=vmem, size = 0x2000, scoped, tag = 'input window, operand 1']
    #allocation6 [shape = 's32[2]{0}', space=sflag, size = 0x8, scoped, tag = 'scoped memory for tpu_custom_call.1']
    #allocation7 [shape = 'u8[8192]{0}', space=vmem, size = 0x2000, scoped, tag = 'input window, operand 2']
    #allocation8 [shape = 'u8[16384]{0}', space=vmem, size = 0x4000, scoped, tag = 'input window, operand 4, single buffered']
    #allocation9 [shape = 's32[1]{0}', space=sflag, size = 0x4, scoped, tag = 'scoped memory for tpu_custom_call.1']
    #allocation10 [shape = 'u8[12288]{0}', space=vmem, size = 0x3000, scoped, tag = 'input window, operand 6, single buffered']
    #allocation11 [shape = 'u8[8192]{0}', space=vmem, size = 0x2000, scoped, tag = 'input window, operand 8, single buffered']
    #allocation12 [shape = 's32[1]{0}', space=sflag, size = 0x4, scoped, tag = 'scoped memory for tpu_custom_call.1']
    #allocation13 [shape = 'u8[8192]{0}', space=vmem, size = 0x2000, scoped, tag = 'output window, operand 0']
    %17 = vsyncpa [#allocation3], 0
    %s18 = scalar_lea.sflag [#allocation3], 1
    %19 = vsyncpa %s18, 0
    %20 = vsyncpa [#allocation6], 0
    %s21 = scalar_lea.sflag [#allocation6], 1
    %22 = vsyncpa %s21, 0
    %23 = vsyncpa [#allocation9], 0
    %24 = vsyncpa [#allocation12], 0
    %25 = vsyncpa [#allocation4], 0
    %s26 = scalar_lea.sflag [#allocation4], 1
    %27 = vsyncpa %s26, 0
    loop: start=0, step=1, limit=4
    $region2: #{tpu_custom_call.1} parent=1 // loop_pre_header
      _
    $region3: #{tpu_custom_call.1} parent=1 // loop_header
      %s29 = sphi 0, %s33
      %p30 = scmp.ge.s32.totalorder %s29, 4
      %s39 = sphi 0, %s41
      %s42 = sphi 0, %s39
      %s43 = sphi 0, %s42
      %s59 = sphi 0, %s43
      %s65 = sphi 0, %s67
      %s68 = sphi 0, %s65
      %s69 = sphi 0, %s68
      %s85 = sphi 0, %s69
      %s91 = sphi 0, %s93
      %s94 = sphi 0, %s91
      %s95 = sphi 0, %s94
      %s111 = sphi 0, %s95
      %s117 = sphi 0, %s119
      %s120 = sphi 0, %s117
      %s121 = sphi 0, %s120
      %s137 = sphi 0, %s121
      %s141 = sphi 0, %s141
      %s143 = sphi 0, %s141
      %s144 = sphi 0, %s143
      %s158 = sphi 0, %s144
      %s162 = sphi 0, %s162
      %s164 = sphi 0, %s162
      %s165 = sphi 0, %s164
      %s179 = sphi 0, %s165
      %s183 = sphi 0, %s183
      %s185 = sphi 0, %s183
      %s186 = sphi 0, %s185
      %s200 = sphi 0, %s186
      %s204 = sphi 0, %s204
      %s206 = sphi 0, %s204
      %s207 = sphi 0, %s206
      %s221 = sphi 0, %s207
      %s225 = sphi 0, %s225
      %s227 = sphi 0, %s225
      %s228 = sphi 0, %s227
      %s242 = sphi 0, %s228
      %s246 = sphi 0, %s246
      %s248 = sphi 0, %s246
      %s249 = sphi 0, %s248
      %s263 = sphi 0, %s249
      %s267 = sphi 0, %s267
      %s269 = sphi 0, %s267
      %s270 = sphi 0, %s269
      %s284 = sphi 0, %s270
      %s288 = sphi 0, %s288
      %s290 = sphi 0, %s288
      %s291 = sphi 0, %s290
      %s305 = sphi 0, %s291
      %s311 = sphi 0, %s313
      %s314 = sphi 0, %s311
      %s315 = sphi 0, %s314
      %s331 = sphi 0, %s315
    $region4: #{tpu_custom_call.1} parent=1 // loop_header_branch
      %32 = sbr.rel (%p30) target = $region8
    $region5: #{tpu_custom_call.1} parent=1 // loop_body
      %s34 = ssub.s32 %s29, 1
      %s35 = ssub.s32 %s29, 2
      %s36 = sadd.s32 %s29, 1
      %s37 = ssub.s32 %s29, %s36
      %p38 = scmp.eq.s32.totalorder %s37, 0
      %s40 = sadd.s32 %s39, 1
      %s41 = scalar_select %p38, %s39, %s40
      %p44 = pneg %p38
      %p45 = scmp.eq.s32.totalorder %s29, 1
      %p46 = por %p44, %p45
      %p47 = scmp.ne.s32.totalorder %s39, %s42
      %p48 = scmp.eq.s32.totalorder %s29, 0
      %p49 = por %p47, %p48
      %p50 = scmp.ne.s32.totalorder %s39, %s42
      %p51 = scmp.eq.s32.totalorder %s34, 1
      %p52 = por %p50, %p51
      %p53 = scmp.ne.s32.totalorder %s42, %s43
      %p54 = scmp.eq.s32.totalorder %s34, 0
      %p55 = por %p53, %p54
      %p56 = scmp.ne.s32.totalorder %s42, %s43
      %p57 = scmp.eq.s32.totalorder %s35, 1
      %p58 = por %p56, %p57
      %p60 = scmp.ne.s32.totalorder %s43, %s59
      %p61 = scmp.eq.s32.totalorder %s35, 0
      %p62 = por %p60, %p61
      %s63 = ssub.s32 %s29, %s36
      %p64 = scmp.eq.s32.totalorder %s63, 0
      %s66 = sadd.s32 %s65, 1
      %s67 = scalar_select %p64, %s65, %s66
      %p70 = pneg %p64
      %p71 = scmp.eq.s32.totalorder %s29, 1
      %p72 = por %p70, %p71
      %p73 = scmp.ne.s32.totalorder %s65, %s68
      %p74 = scmp.eq.s32.totalorder %s29, 0
      %p75 = por %p73, %p74
      %p76 = scmp.ne.s32.totalorder %s65, %s68
      %p77 = scmp.eq.s32.totalorder %s34, 1
      %p78 = por %p76, %p77
      %p79 = scmp.ne.s32.totalorder %s68, %s69
      %p80 = scmp.eq.s32.totalorder %s34, 0
      %p81 = por %p79, %p80
      %p82 = scmp.ne.s32.totalorder %s68, %s69
      %p83 = scmp.eq.s32.totalorder %s35, 1
      %p84 = por %p82, %p83
      %p86 = scmp.ne.s32.totalorder %s69, %s85
      %p87 = scmp.eq.s32.totalorder %s35, 0
      %p88 = por %p86, %p87
      %s89 = ssub.s32 %s29, %s36
      %p90 = scmp.eq.s32.totalorder %s89, 0
      %s92 = sadd.s32 %s91, 1
      %s93 = scalar_select %p90, %s91, %s92
      %p96 = pneg %p90
      %p97 = scmp.eq.s32.totalorder %s29, 1
      %p98 = por %p96, %p97
      %p99 = scmp.ne.s32.totalorder %s91, %s94
      %p100 = scmp.eq.s32.totalorder %s29, 0
      %p101 = por %p99, %p100
      %p102 = scmp.ne.s32.totalorder %s91, %s94
      %p103 = scmp.eq.s32.totalorder %s34, 1
      %p104 = por %p102, %p103
      %p105 = scmp.ne.s32.totalorder %s94, %s95
      %p106 = scmp.eq.s32.totalorder %s34, 0
      %p107 = por %p105, %p106
      %p108 = scmp.ne.s32.totalorder %s94, %s95
      %p109 = scmp.eq.s32.totalorder %s35, 1
      %p110 = por %p108, %p109
      %p112 = scmp.ne.s32.totalorder %s95, %s111
      %p113 = scmp.eq.s32.totalorder %s35, 0
      %p114 = por %p112, %p113
      %s115 = ssub.s32 %s29, %s36
      %p116 = scmp.eq.s32.totalorder %s115, 0
      %s118 = sadd.s32 %s117, 1
      %s119 = scalar_select %p116, %s117, %s118
      %p122 = pneg %p116
      %p123 = scmp.eq.s32.totalorder %s29, 1
      %p124 = por %p122, %p123
      %p125 = scmp.ne.s32.totalorder %s117, %s120
      %p126 = scmp.eq.s32.totalorder %s29, 0
      %p127 = por %p125, %p126
      %p128 = scmp.ne.s32.totalorder %s117, %s120
      %p129 = scmp.eq.s32.totalorder %s34, 1
      %p130 = por %p128, %p129
      %p131 = scmp.ne.s32.totalorder %s120, %s121
      %p132 = scmp.eq.s32.totalorder %s34, 0
      %p133 = por %p131, %p132
      %p134 = scmp.ne.s32.totalorder %s120, %s121
      %p135 = scmp.eq.s32.totalorder %s35, 1
      %p136 = por %p134, %p135
      %p138 = scmp.ne.s32.totalorder %s121, %s137
      %p139 = scmp.eq.s32.totalorder %s35, 0
      %p140 = por %p138, %p139
      %s142 = sadd.s32 %s141, 1
      %p145 = scmp.eq.s32.totalorder %s29, 1
      %p146 = scmp.ne.s32.totalorder %s141, %s143
      %p147 = scmp.eq.s32.totalorder %s29, 0
      %p148 = por %p146, %p147
      %p149 = scmp.ne.s32.totalorder %s141, %s143
      %p150 = scmp.eq.s32.totalorder %s34, 1
      %p151 = por %p149, %p150
      %p152 = scmp.ne.s32.totalorder %s143, %s144
      %p153 = scmp.eq.s32.totalorder %s34, 0
      %p154 = por %p152, %p153
      %p155 = scmp.ne.s32.totalorder %s143, %s144
      %p156 = scmp.eq.s32.totalorder %s35, 1
      %p157 = por %p155, %p156
      %p159 = scmp.ne.s32.totalorder %s144, %s158
      %p160 = scmp.eq.s32.totalorder %s35, 0
      %p161 = por %p159, %p160
      %s163 = sadd.s32 %s162, 1
      %p166 = scmp.eq.s32.totalorder %s29, 1
      %p167 = scmp.ne.s32.totalorder %s162, %s164
      %p168 = scmp.eq.s32.totalorder %s29, 0
      %p169 = por %p167, %p168
      %p170 = scmp.ne.s32.totalorder %s162, %s164
      %p171 = scmp.eq.s32.totalorder %s34, 1
      %p172 = por %p170, %p171
      %p173 = scmp.ne.s32.totalorder %s164, %s165
      %p174 = scmp.eq.s32.totalorder %s34, 0
      %p175 = por %p173, %p174
      %p176 = scmp.ne.s32.totalorder %s164, %s165
      %p177 = scmp.eq.s32.totalorder %s35, 1
      %p178 = por %p176, %p177
      %p180 = scmp.ne.s32.totalorder %s165, %s179
      %p181 = scmp.eq.s32.totalorder %s35, 0
      %p182 = por %p180, %p181
      %s184 = sadd.s32 %s183, 1
      %p187 = scmp.eq.s32.totalorder %s29, 1
      %p188 = scmp.ne.s32.totalorder %s183, %s185
      %p189 = scmp.eq.s32.totalorder %s29, 0
      %p190 = por %p188, %p189
      %p191 = scmp.ne.s32.totalorder %s183, %s185
      %p192 = scmp.eq.s32.totalorder %s34, 1
      %p193 = por %p191, %p192
      %p194 = scmp.ne.s32.totalorder %s185, %s186
      %p195 = scmp.eq.s32.totalorder %s34, 0
      %p196 = por %p194, %p195
      %p197 = scmp.ne.s32.totalorder %s185, %s186
      %p198 = scmp.eq.s32.totalorder %s35, 1
      %p199 = por %p197, %p198
      %p201 = scmp.ne.s32.totalorder %s186, %s200
      %p202 = scmp.eq.s32.totalorder %s35, 0
      %p203 = por %p201, %p202
      %s205 = sadd.s32 %s204, 1
      %p208 = scmp.eq.s32.totalorder %s29, 1
      %p209 = scmp.ne.s32.totalorder %s204, %s206
      %p210 = scmp.eq.s32.totalorder %s29, 0
      %p211 = por %p209, %p210
      %p212 = scmp.ne.s32.totalorder %s204, %s206
      %p213 = scmp.eq.s32.totalorder %s34, 1
      %p214 = por %p212, %p213
      %p215 = scmp.ne.s32.totalorder %s206, %s207
      %p216 = scmp.eq.s32.totalorder %s34, 0
      %p217 = por %p215, %p216
      %p218 = scmp.ne.s32.totalorder %s206, %s207
      %p219 = scmp.eq.s32.totalorder %s35, 1
      %p220 = por %p218, %p219
      %p222 = scmp.ne.s32.totalorder %s207, %s221
      %p223 = scmp.eq.s32.totalorder %s35, 0
      %p224 = por %p222, %p223
      %s226 = sadd.s32 %s225, 1
      %p229 = scmp.eq.s32.totalorder %s29, 1
      %p230 = scmp.ne.s32.totalorder %s225, %s227
      %p231 = scmp.eq.s32.totalorder %s29, 0
      %p232 = por %p230, %p231
      %p233 = scmp.ne.s32.totalorder %s225, %s227
      %p234 = scmp.eq.s32.totalorder %s34, 1
      %p235 = por %p233, %p234
      %p236 = scmp.ne.s32.totalorder %s227, %s228
      %p237 = scmp.eq.s32.totalorder %s34, 0
      %p238 = por %p236, %p237
      %p239 = scmp.ne.s32.totalorder %s227, %s228
      %p240 = scmp.eq.s32.totalorder %s35, 1
      %p241 = por %p239, %p240
      %p243 = scmp.ne.s32.totalorder %s228, %s242
      %p244 = scmp.eq.s32.totalorder %s35, 0
      %p245 = por %p243, %p244
      %s247 = sadd.s32 %s246, 1
      %p250 = scmp.eq.s32.totalorder %s29, 1
      %p251 = scmp.ne.s32.totalorder %s246, %s248
      %p252 = scmp.eq.s32.totalorder %s29, 0
      %p253 = por %p251, %p252
      %p254 = scmp.ne.s32.totalorder %s246, %s248
      %p255 = scmp.eq.s32.totalorder %s34, 1
      %p256 = por %p254, %p255
      %p257 = scmp.ne.s32.totalorder %s248, %s249
      %p258 = scmp.eq.s32.totalorder %s34, 0
      %p259 = por %p257, %p258
      %p260 = scmp.ne.s32.totalorder %s248, %s249
      %p261 = scmp.eq.s32.totalorder %s35, 1
      %p262 = por %p260, %p261
      %p264 = scmp.ne.s32.totalorder %s249, %s263
      %p265 = scmp.eq.s32.totalorder %s35, 0
      %p266 = por %p264, %p265
      %s268 = sadd.s32 %s267, 1
      %p271 = scmp.eq.s32.totalorder %s29, 1
      %p272 = scmp.ne.s32.totalorder %s267, %s269
      %p273 = scmp.eq.s32.totalorder %s29, 0
      %p274 = por %p272, %p273
      %p275 = scmp.ne.s32.totalorder %s267, %s269
      %p276 = scmp.eq.s32.totalorder %s34, 1
      %p277 = por %p275, %p276
      %p278 = scmp.ne.s32.totalorder %s269, %s270
      %p279 = scmp.eq.s32.totalorder %s34, 0
      %p280 = por %p278, %p279
      %p281 = scmp.ne.s32.totalorder %s269, %s270
      %p282 = scmp.eq.s32.totalorder %s35, 1
      %p283 = por %p281, %p282
      %p285 = scmp.ne.s32.totalorder %s270, %s284
      %p286 = scmp.eq.s32.totalorder %s35, 0
      %p287 = por %p285, %p286
      %s289 = sadd.s32 %s288, 1
      %p292 = scmp.eq.s32.totalorder %s29, 1
      %p293 = scmp.ne.s32.totalorder %s288, %s290
      %p294 = scmp.eq.s32.totalorder %s29, 0
      %p295 = por %p293, %p294
      %p296 = scmp.ne.s32.totalorder %s288, %s290
      %p297 = scmp.eq.s32.totalorder %s34, 1
      %p298 = por %p296, %p297
      %p299 = scmp.ne.s32.totalorder %s290, %s291
      %p300 = scmp.eq.s32.totalorder %s34, 0
      %p301 = por %p299, %p300
      %p302 = scmp.ne.s32.totalorder %s290, %s291
      %p303 = scmp.eq.s32.totalorder %s35, 1
      %p304 = por %p302, %p303
      %p306 = scmp.ne.s32.totalorder %s291, %s305
      %p307 = scmp.eq.s32.totalorder %s35, 0
      %p308 = por %p306, %p307
      %s309 = ssub.s32 %s29, %s36
      %p310 = scmp.eq.s32.totalorder %s309, 0
      %s312 = sadd.s32 %s311, 1
      %s313 = scalar_select %p310, %s311, %s312
      %p316 = pneg %p310
      %p317 = scmp.eq.s32.totalorder %s29, 1
      %p318 = por %p316, %p317
      %p319 = scmp.ne.s32.totalorder %s311, %s314
      %p320 = scmp.eq.s32.totalorder %s29, 0
      %p321 = por %p319, %p320
      %p322 = scmp.ne.s32.totalorder %s311, %s314
      %p323 = scmp.eq.s32.totalorder %s34, 1
      %p324 = por %p322, %p323
      %p325 = scmp.ne.s32.totalorder %s314, %s315
      %p326 = scmp.eq.s32.totalorder %s34, 0
      %p327 = por %p325, %p326
      %p328 = scmp.ne.s32.totalorder %s314, %s315
      %p329 = scmp.eq.s32.totalorder %s35, 1
      %p330 = por %p328, %p329
      %p332 = scmp.ne.s32.totalorder %s315, %s331
      %p333 = scmp.eq.s32.totalorder %s35, 0
      %p334 = por %p332, %p333
      %p335 = scmp.le.s32.totalorder 1, %s29
      %p336 = scmp.lt.s32.totalorder %s29, 3
      %p337 = pnand %p335, %p336
      %p338 = pneg %p337
      // Predicated region
      $region9: #{tpu_custom_call.1} parent=5 // pred_check
        _
      $region10: #{tpu_custom_call.1} parent=5 // pred_check_branch
        %340 = sbr.rel (%p337) target = $region12
      $region11: #{tpu_custom_call.1} parent=5 // pred_region
        %s341 = ssub.s32 %s29, 1
        // Predicated region
        $region13: #{tpu_custom_call.1} parent=11 // pred_check
          %p342 = pneg %p154
        $region14: #{tpu_custom_call.1} parent=11 // pred_check_branch
          %344 = sbr.rel (%p342) target = $region16
        $region15: #{tpu_custom_call.1} parent=11 // pred_region
          %s346 = ssub.s32 512, 512
          %347 = vsyncadd [#allocation9], %s346
          %s348 = sshll.u32 [#allocation8], 4
          %s349 = int_to_ptr.vmem [resolvable:$true] %s348
          %354 = dma.hbm_to_vmem [thread:$0]  %s4, 512, %s349, [#allocation9], 128, 128, 8
        $region16: #{tpu_custom_call.1} parent=11 // pred_fallthru
          _
        // Predicated region
        $region17: #{tpu_custom_call.1} parent=11 // pred_check
          %p355 = pneg %p175
        $region18: #{tpu_custom_call.1} parent=11 // pred_check_branch
          %357 = sbr.rel (%p355) target = $region20
        $region19: #{tpu_custom_call.1} parent=11 // pred_region
          _
        $region20: #{tpu_custom_call.1} parent=11 // pred_fallthru
          _
        // Predicated region
        $region21: #{tpu_custom_call.1} parent=11 // pred_check
          %p358 = pneg %p196
        $region22: #{tpu_custom_call.1} parent=11 // pred_check_branch
          %360 = sbr.rel (%p358) target = $region24
        $region23: #{tpu_custom_call.1} parent=11 // pred_region
          %s362 = ssub.s32 384, 384
          %363 = vsyncadd [#allocation9], %s362
          %s364 = sshll.u32 [#allocation10], 4
          %s365 = int_to_ptr.vmem [resolvable:$true] %s364
          %370 = dma.hbm_to_vmem [thread:$0]  %s6, 384, %s365, [#allocation9], 128, 128, 8
        $region24: #{tpu_custom_call.1} parent=11 // pred_fallthru
          _
        // Predicated region
        $region25: #{tpu_custom_call.1} parent=11 // pred_check
          %p371 = pneg %p217
        $region26: #{tpu_custom_call.1} parent=11 // pred_check_branch
          %373 = sbr.rel (%p371) target = $region28
        $region27: #{tpu_custom_call.1} parent=11 // pred_region
          _
        $region28: #{tpu_custom_call.1} parent=11 // pred_fallthru
          _
        // Predicated region
        $region29: #{tpu_custom_call.1} parent=11 // pred_check
          %p374 = pneg %p238
        $region30: #{tpu_custom_call.1} parent=11 // pred_check_branch
          %376 = sbr.rel (%p374) target = $region32
        $region31: #{tpu_custom_call.1} parent=11 // pred_region
          %s378 = ssub.s32 256, 256
          %379 = vsyncadd [#allocation12], %s378
          %s380 = sshll.u32 [#allocation11], 4
          %s381 = int_to_ptr.vmem [resolvable:$true] %s380
          %386 = dma.hbm_to_vmem [thread:$0]  %s8, 256, %s381, [#allocation12], 128, 128, 8
        $region32: #{tpu_custom_call.1} parent=11 // pred_fallthru
          _
        // Predicated region
        $region33: #{tpu_custom_call.1} parent=11 // pred_check
          %p387 = pneg %p259
        $region34: #{tpu_custom_call.1} parent=11 // pred_check_branch
          %389 = sbr.rel (%p387) target = $region36
        $region35: #{tpu_custom_call.1} parent=11 // pred_region
          _
        $region36: #{tpu_custom_call.1} parent=11 // pred_fallthru
          _
        // Predicated region
        $region37: #{tpu_custom_call.1} parent=11 // pred_check
          %p390 = pneg %p280
        $region38: #{tpu_custom_call.1} parent=11 // pred_check_branch
          %392 = sbr.rel (%p390) target = $region40
        $region39: #{tpu_custom_call.1} parent=11 // pred_region
          _
        $region40: #{tpu_custom_call.1} parent=11 // pred_fallthru
          _
        // Predicated region
        $region41: #{tpu_custom_call.1} parent=11 // pred_check
          %p393 = pneg %p301
        $region42: #{tpu_custom_call.1} parent=11 // pred_check_branch
          %395 = sbr.rel (%p393) target = $region44
        $region43: #{tpu_custom_call.1} parent=11 // pred_region
          _
        $region44: #{tpu_custom_call.1} parent=11 // pred_fallthru
          _
      $region12: #{tpu_custom_call.1} parent=5 // pred_fallthru
        _
      %p396 = scmp.lt.s32.totalorder %s29, 2
      // Predicated region
      $region45: #{tpu_custom_call.1} parent=5 // pred_check
        %p397 = pneg %p396
      $region46: #{tpu_custom_call.1} parent=5 // pred_check_branch
        %399 = sbr.rel (%p397) target = $region48
      $region47: #{tpu_custom_call.1} parent=5 // pred_region
        // Predicated region
        $region49: #{tpu_custom_call.1} parent=47 // pred_check
          %p400 = pneg %p49
        $region50: #{tpu_custom_call.1} parent=47 // pred_check_branch
          %402 = sbr.rel (%p400) target = $region52
        $region51: #{tpu_custom_call.1} parent=47 // pred_region
          %s403 = sand.u32 %s39, 1
          %s404 = scalar_lea.sflag [#allocation3], %s403
          %s405 = sand.u32 %s39, 1
          %s406 = smul.addr %s405, 8
          %s407 = scalar_lea.vmem [#allocation2], %s406
          %s409 = ssub.s32 128, 128
          %410 = vsyncadd %s404, %s409
          %s411 = smul.addr %s29, 128
          %s412 = scalar_lea.hbm %s0, %s411
          %s414 = sshll.u32 %s407, 4
          %s415 = int_to_ptr.vmem [resolvable:$true] %s414
          %417 = dma.hbm_to_vmem [thread:$0]  %s412, 128, %s415, %s404
        $region52: #{tpu_custom_call.1} parent=47 // pred_fallthru
          _
        // Predicated region
        $region53: #{tpu_custom_call.1} parent=47 // pred_check
          %p418 = pneg %p75
        $region54: #{tpu_custom_call.1} parent=47 // pred_check_branch
          %420 = sbr.rel (%p418) target = $region56
        $region55: #{tpu_custom_call.1} parent=47 // pred_region
          %s421 = sand.u32 %s29, 1
          %s422 = scalar_lea.sflag [#allocation6], %s421
          %s423 = sand.u32 %s65, 1
          %s424 = smul.addr %s423, 8
          %s425 = scalar_lea.vmem [#allocation5], %s424
          %s427 = ssub.s32 128, 128
          %428 = vsyncadd %s422, %s427
          %s429 = smul.addr %s29, 128
          %s430 = scalar_lea.hbm %s1, %s429
          %s432 = sshll.u32 %s425, 4
          %s433 = int_to_ptr.vmem [resolvable:$true] %s432
          %435 = dma.hbm_to_vmem [thread:$0]  %s430, 128, %s433, %s422
        $region56: #{tpu_custom_call.1} parent=47 // pred_fallthru
          _
        // Predicated region
        $region57: #{tpu_custom_call.1} parent=47 // pred_check
          %p436 = pneg %p101
        $region58: #{tpu_custom_call.1} parent=47 // pred_check_branch
          %438 = sbr.rel (%p436) target = $region60
        $region59: #{tpu_custom_call.1} parent=47 // pred_region
          %s439 = sand.u32 %s29, 1
          %s440 = scalar_lea.sflag [#allocation6], %s439
          %s441 = sand.u32 %s91, 1
          %s442 = smul.addr %s441, 8
          %s443 = scalar_lea.vmem [#allocation7], %s442
          %s445 = ssub.s32 128, 128
          %446 = vsyncadd %s440, %s445
          %s447 = smul.addr %s29, 128
          %s448 = scalar_lea.hbm %s2, %s447
          %s450 = sshll.u32 %s443, 4
          %s451 = int_to_ptr.vmem [resolvable:$true] %s450
          %453 = dma.hbm_to_vmem [thread:$0]  %s448, 128, %s451, %s440
        $region60: #{tpu_custom_call.1} parent=47 // pred_fallthru
          _
        // Predicated region
        $region61: #{tpu_custom_call.1} parent=47 // pred_check
          %p454 = pneg %p127
        $region62: #{tpu_custom_call.1} parent=47 // pred_check_branch
          %456 = sbr.rel (%p454) target = $region64
        $region63: #{tpu_custom_call.1} parent=47 // pred_region
          %p457 = scmp.lt.s32.totalorder %s29, 1
          %s458 = scalar_select %p457, %s29, 1
          %s459 = scalar_lea.vmem %s3, %s458
        $region64: #{tpu_custom_call.1} parent=47 // pred_fallthru
          _
      $region48: #{tpu_custom_call.1} parent=5 // pred_fallthru
        _
      %p460 = scmp.le.s32.totalorder 1, %s29
      %p461 = scmp.lt.s32.totalorder %s29, 3
      %p462 = pnand %p460, %p461
      %p463 = pneg %p462
      // Predicated region
      $region65: #{tpu_custom_call.1} parent=5 // pred_check
        _
      $region66: #{tpu_custom_call.1} parent=5 // pred_check_branch
        %465 = sbr.rel (%p462) target = $region68
      $region67: #{tpu_custom_call.1} parent=5 // pred_region
        %s466 = ssub.s32 %s29, 1
        %s467 = sand.u32 %s42, 1
        %s468 = scalar_lea.sflag [#allocation3], %s467
        %s469 = sand.u32 %s42, 1
        %s470 = smul.addr %s469, 8
        %s471 = scalar_lea.vmem [#allocation2], %s470
        // Predicated region
        $region69: #{tpu_custom_call.1} parent=67 // pred_check
          %p472 = pneg %p55
        $region70: #{tpu_custom_call.1} parent=67 // pred_check_branch
          %474 = sbr.rel (%p472) target = $region72
        $region71: #{tpu_custom_call.1} parent=67 // pred_region
          %475 = dma.done %s468, 128
        $region72: #{tpu_custom_call.1} parent=67 // pred_fallthru
          _
        %s476 = sand.u32 %s34, 1
        %s477 = scalar_lea.sflag [#allocation6], %s476
        %s478 = sand.u32 %s68, 1
        %s479 = smul.addr %s478, 8
        %s480 = scalar_lea.vmem [#allocation5], %s479
        // Predicated region
        $region73: #{tpu_custom_call.1} parent=67 // pred_check
          %p481 = pneg %p81
        $region74: #{tpu_custom_call.1} parent=67 // pred_check_branch
          %483 = sbr.rel (%p481) target = $region76
        $region75: #{tpu_custom_call.1} parent=67 // pred_region
          %484 = dma.done %s477, 128
        $region76: #{tpu_custom_call.1} parent=67 // pred_fallthru
          _
        %s485 = sand.u32 %s34, 1
        %s486 = scalar_lea.sflag [#allocation6], %s485
        %s487 = sand.u32 %s94, 1
        %s488 = smul.addr %s487, 8
        %s489 = scalar_lea.vmem [#allocation7], %s488
        // Predicated region
        $region77: #{tpu_custom_call.1} parent=67 // pred_check
          %p490 = pneg %p107
        $region78: #{tpu_custom_call.1} parent=67 // pred_check_branch
          %492 = sbr.rel (%p490) target = $region80
        $region79: #{tpu_custom_call.1} parent=67 // pred_region
          %493 = dma.done %s486, 128
        $region80: #{tpu_custom_call.1} parent=67 // pred_fallthru
          _
        // Predicated region
        $region81: #{tpu_custom_call.1} parent=67 // pred_check
          %p494 = pneg %p154
        $region82: #{tpu_custom_call.1} parent=67 // pred_check_branch
          %496 = sbr.rel (%p494) target = $region84
        $region83: #{tpu_custom_call.1} parent=67 // pred_region
          %497 = dma.done [#allocation9], 512
        $region84: #{tpu_custom_call.1} parent=67 // pred_fallthru
          _
        // Predicated region
        $region85: #{tpu_custom_call.1} parent=67 // pred_check
          %p498 = pneg %p196
        $region86: #{tpu_custom_call.1} parent=67 // pred_check_branch
          %500 = sbr.rel (%p498) target = $region88
        $region87: #{tpu_custom_call.1} parent=67 // pred_region
          %501 = dma.done [#allocation9], 384
        $region88: #{tpu_custom_call.1} parent=67 // pred_fallthru
          _
        // Predicated region
        $region89: #{tpu_custom_call.1} parent=67 // pred_check
          %p502 = pneg %p238
        $region90: #{tpu_custom_call.1} parent=67 // pred_check_branch
          %504 = sbr.rel (%p502) target = $region92
        $region91: #{tpu_custom_call.1} parent=67 // pred_region
          %505 = dma.done [#allocation12], 256
        $region92: #{tpu_custom_call.1} parent=67 // pred_fallthru
          _
        %s506 = sand.u32 %s42, 1
        %s507 = scalar_lea.sflag [#allocation3], %s506
        %s508 = sand.u32 %s42, 1
        %s509 = smul.addr %s508, 8
        %s510 = scalar_lea.vmem [#allocation2], %s509
        %p511 = pneg %p55
        %p512 = pneg %p52
        %s513 = sand.u32 %s34, 1
        %s514 = scalar_lea.sflag [#allocation6], %s513
        %s515 = sand.u32 %s68, 1
        %s516 = smul.addr %s515, 8
        %s517 = scalar_lea.vmem [#allocation5], %s516
        %p518 = pneg %p81
        %p519 = pneg %p78
        %s520 = sand.u32 %s34, 1
        %s521 = scalar_lea.sflag [#allocation6], %s520
        %s522 = sand.u32 %s94, 1
        %s523 = smul.addr %s522, 8
        %s524 = scalar_lea.vmem [#allocation7], %s523
        %p525 = pneg %p107
        %p526 = pneg %p104
        %p527 = scmp.lt.s32.totalorder %s34, 1
        %s528 = scalar_select %p527, %s34, 1
        %s529 = scalar_lea.vmem %s3, %s528
        %p530 = pneg %p133
        %p531 = pneg %p130
        %p532 = pneg %p154
        %p533 = pneg %p151
        %p534 = pneg %p175
        %p535 = pneg %p172
        %p536 = pneg %p196
        %p537 = pneg %p193
        %p538 = pneg %p217
        %p539 = pneg %p214
        %p540 = pneg %p238
        %p541 = pneg %p235
        %p542 = pneg %p259
        %p543 = pneg %p256
        %p544 = pneg %p280
        %p545 = pneg %p277
        %p546 = pneg %p301
        %p547 = pneg %p298
        %p548 = pneg %p327
        %p549 = pneg %p324
        %s550 = sand.u32 %s314, 1
        %s551 = scalar_lea.sflag [#allocation4], %s550
        %s552 = sand.u32 %s314, 1
        %s553 = smul.addr %s552, 8
        %s554 = scalar_lea.vmem [#allocation13], %s553
        %p555 = scmp.lt.s32.totalorder %s34, 1
        %s556 = scalar_select %p555, %s34, 1
        %s557 = scalar_lea.vmem %s3, %s556
        %v558 = vld [vmem:[%s471] sm:$0xff]
        %v559 = vld [vmem:[%s480] sm:$0xff]
        %v560 = vld [vmem:[%s489] sm:$0xff]
        %v561 = vld [vmem:[%s557] sm:$0x1]
        %v562 = vld [vmem:[#allocation8] sm:$0xff]
        %v563 = vld [vmem:[#allocation8 + $0x8] sm:$0xff]
        %v564 = vld [vmem:[#allocation8 + $0x10] sm:$0xff]
        %v565 = vld [vmem:[#allocation8 + $0x18] sm:$0xff]
        %v566 = vld [vmem:[%s5] sm:$0x1]
        %v568 = vlaneseq
        %v569 = vshrl.u32 %v568, 7
        %v570 = vsub.s32 0, %v569
        %v571 = vrot.slane %v566, %v570
        %vm573 = vcmask 261120
        %v575 = vsel %vm573, %v558, 0
        %577 = vmatprep.subr.mxu0 0.0
        %578 = vmatpush1.msra.mxu0 %v562
        %579 = vmatprep.subr.mxu0 0.0
        %580 = vmatpush1.msra.mxu0 %v563
        %581 = vmatprep.subr.mxu0 0.0
        %582 = vmatpush1.msra.mxu0 %v564
        %583 = vmatprep.subr.mxu0 0.0
        %584 = vmatpush1.msra.mxu0 %v565
        %585 = vmatprep.subr.mxu0 0.0
        %586 = vmatpush1.msra.mxu0 0.0
        %587 = vmatprep.subr.mxu0 0.0
        %588 = vmatpush1.msra.mxu0 0.0
        %589 = vmatprep.subr.mxu0 0.0
        %590 = vmatpush1.msra.mxu0 0.0
        %591 = vmatprep.subr.mxu0 0.0
        %592 = vmatpush1.msra.mxu0 0.0
        %593 = vmatprep.subr.mxu0 0.0
        %594 = vmatpush1.msra.mxu0 0.0
        %595 = vmatprep.subr.mxu0 0.0
        %596 = vmatpush1.msra.mxu0 0.0
        %597 = vmatprep.subr.mxu0 0.0
        %598 = vmatpush1.msra.mxu0 0.0
        %599 = vmatprep.subr.mxu0 0.0
        %600 = vmatpush1.msra.mxu0 0.0
        %601 = vmatprep.subr.mxu0 0.0
        %602 = vmatpush1.msra.mxu0 0.0
        %603 = vmatprep.subr.mxu0 0.0
        %604 = vmatpush1.msra.mxu0 0.0
        %605 = vmatprep.subr.mxu0 0.0
        %606 = vmatpush1.msra.mxu0 0.0
        %607 = vmatprep.subr.mxu0 0.0
        %608 = vmatpush1.msra.mxu0 0.0
        %609 = vmatprep.subr.mxu0 0.0
        %610 = vmatpush1.msra.mxu0 0.0
        %611 = vmatprep.subr.mxu0 0.0
        %612 = vmatpush1.msra.mxu0 0.0
        %613 = vmatprep.subr.mxu0 0.0
        %614 = vmatpush1.msra.mxu0 0.0
        %615 = vmatprep.subr.mxu0 0.0
        %616 = vmatpush1.msra.mxu0 0.0
        %617 = vmatprep.subr.mxu0 0.0
        %618 = vmatpush1.msra.mxu0 0.0
        %619 = vmatprep.subr.mxu0 0.0
        %620 = vmatpush1.msra.mxu0 0.0
        %621 = vmatprep.subr.mxu0 0.0
        %622 = vmatpush1.msra.mxu0 0.0
        %623 = vmatprep.subr.mxu0 0.0
        %624 = vmatpush1.msra.mxu0 0.0
        %625 = vmatprep.subr.mxu0 0.0
        %626 = vmatpush1.msra.mxu0 0.0
        %627 = vmatprep.subr.mxu0 0.0
        %628 = vmatpush1.msra.mxu0 0.0
        %629 = vmatprep.subr.mxu0 0.0
        %630 = vmatpush1.msra.mxu0 0.0
        %631 = vmatprep.subr.mxu0 0.0
        %632 = vmatpush1.msra.mxu0 0.0
        %633 = vmatprep.subr.mxu0 0.0
        %634 = vmatpush1.msra.mxu0 0.0
        %635 = vmatprep.subr.mxu0 0.0
        %636 = vmatpush1.msra.mxu0 0.0
        %637 = vmatprep.subr.mxu0 0.0
        %638 = vmatpush1.msra.mxu0 0.0
        %639 = vmatprep.subr.mxu0 0.0
        %640 = vmatpush1.msra.mxu0 0.0
        %641 = vmatprep.mubr.f32.mxu0 0.0
        %642 = vmatmul.mubr.f32.gmra.mrb[0].mxu0 %v575
        %v643 = vpop.f32.mrb[0].mxu0
        %v644 = vadd.f32 %v571, %v643
        %v645 = vpop.f32.mrb[0].mxu0
        %646 = vdwg.mxu0
        %v647 = vmul.f32 %v644, 0.35355338
        %v648 = vld [vmem:[#allocation10] sm:$0xff]
        %v649 = vld [vmem:[#allocation10 + $0x8] sm:$0xff]
        %v650 = vld [vmem:[#allocation10 + $0x10] sm:$0xff]
        %v651 = vld [vmem:[%s7] sm:$0x1]
        %v653 = vlaneseq
        %v654 = vshrl.u32 %v653, 7
        %v655 = vsub.s32 0, %v654
        %v656 = vrot.slane %v651, %v655
        %vm658 = vcmask 195584
        %v660 = vsel %vm658, %v559, 0
        %662 = vmatprep.subr.mxu0 0.0
        %663 = vmatpush1.msra.mxu0 %v648
        %664 = vmatprep.subr.mxu0 0.0
        %665 = vmatpush1.msra.mxu0 %v649
        %666 = vmatprep.subr.mxu0 0.0
        %667 = vmatpush1.msra.mxu0 %v650
        %668 = vmatprep.subr.mxu0 0.0
        %669 = vmatpush1.msra.mxu0 0.0
        %670 = vmatprep.subr.mxu0 0.0
        %671 = vmatpush1.msra.mxu0 0.0
        %672 = vmatprep.subr.mxu0 0.0
        %673 = vmatpush1.msra.mxu0 0.0
        %674 = vmatprep.subr.mxu0 0.0
        %675 = vmatpush1.msra.mxu0 0.0
        %676 = vmatprep.subr.mxu0 0.0
        %677 = vmatpush1.msra.mxu0 0.0
        %678 = vmatprep.subr.mxu0 0.0
        %679 = vmatpush1.msra.mxu0 0.0
        %680 = vmatprep.subr.mxu0 0.0
        %681 = vmatpush1.msra.mxu0 0.0
        %682 = vmatprep.subr.mxu0 0.0
        %683 = vmatpush1.msra.mxu0 0.0
        %684 = vmatprep.subr.mxu0 0.0
        %685 = vmatpush1.msra.mxu0 0.0
        %686 = vmatprep.subr.mxu0 0.0
        %687 = vmatpush1.msra.mxu0 0.0
        %688 = vmatprep.subr.mxu0 0.0
        %689 = vmatpush1.msra.mxu0 0.0
        %690 = vmatprep.subr.mxu0 0.0
        %691 = vmatpush1.msra.mxu0 0.0
        %692 = vmatprep.subr.mxu0 0.0
        %693 = vmatpush1.msra.mxu0 0.0
        %694 = vmatprep.subr.mxu0 0.0
        %695 = vmatpush1.msra.mxu0 0.0
        %696 = vmatprep.subr.mxu0 0.0
        %697 = vmatpush1.msra.mxu0 0.0
        %698 = vmatprep.subr.mxu0 0.0
        %699 = vmatpush1.msra.mxu0 0.0
        %700 = vmatprep.subr.mxu0 0.0
        %701 = vmatpush1.msra.mxu0 0.0
        %702 = vmatprep.subr.mxu0 0.0
        %703 = vmatpush1.msra.mxu0 0.0
        %704 = vmatprep.subr.mxu0 0.0
        %705 = vmatpush1.msra.mxu0 0.0
        %706 = vmatprep.subr.mxu0 0.0
        %707 = vmatpush1.msra.mxu0 0.0
        %708 = vmatprep.subr.mxu0 0.0
        %709 = vmatpush1.msra.mxu0 0.0
        %710 = vmatprep.subr.mxu0 0.0
        %711 = vmatpush1.msra.mxu0 0.0
        %712 = vmatprep.subr.mxu0 0.0
        %713 = vmatpush1.msra.mxu0 0.0
        %714 = vmatprep.subr.mxu0 0.0
        %715 = vmatpush1.msra.mxu0 0.0
        %716 = vmatprep.subr.mxu0 0.0
        %717 = vmatpush1.msra.mxu0 0.0
        %718 = vmatprep.subr.mxu0 0.0
        %719 = vmatpush1.msra.mxu0 0.0
        %720 = vmatprep.subr.mxu0 0.0
        %721 = vmatpush1.msra.mxu0 0.0
        %722 = vmatprep.subr.mxu0 0.0
        %723 = vmatpush1.msra.mxu0 0.0
        %724 = vmatprep.subr.mxu0 0.0
        %725 = vmatpush1.msra.mxu0 0.0
        %726 = vmatprep.mubr.f32.mxu0 0.0
        %727 = vmatmul.mubr.f32.gmra.mrb[0].mxu0 %v660
        %v728 = vpop.f32.mrb[0].mxu0
        %v729 = vadd.f32 %v656, %v728
        %v730 = vpop.f32.mrb[0].mxu0
        %731 = vdwg.mxu0
        %v732 = vld [vmem:[#allocation11] sm:$0xff]
        %v733 = vld [vmem:[#allocation11 + $0x8] sm:$0xff]
        %v734 = vld [vmem:[%s9] sm:$0x1]
        %v736 = vlaneseq
        %v737 = vshrl.u32 %v736, 7
        %v738 = vsub.s32 0, %v737
        %v739 = vrot.slane %v734, %v738
        %vm741 = vcmask 130048
        %v743 = vsel %vm741, %v560, 0
        %745 = vmatprep.subr.mxu0 0.0
        %746 = vmatpush1.msra.mxu0 %v732
        %747 = vmatprep.subr.mxu0 0.0
        %748 = vmatpush1.msra.mxu0 %v733
        %749 = vmatprep.subr.mxu0 0.0
        %750 = vmatpush1.msra.mxu0 0.0
        %751 = vmatprep.subr.mxu0 0.0
        %752 = vmatpush1.msra.mxu0 0.0
        %753 = vmatprep.subr.mxu0 0.0
        %754 = vmatpush1.msra.mxu0 0.0
        %755 = vmatprep.subr.mxu0 0.0
        %756 = vmatpush1.msra.mxu0 0.0
        %757 = vmatprep.subr.mxu0 0.0
        %758 = vmatpush1.msra.mxu0 0.0
        %759 = vmatprep.subr.mxu0 0.0
        %760 = vmatpush1.msra.mxu0 0.0
        %761 = vmatprep.subr.mxu0 0.0
        %762 = vmatpush1.msra.mxu0 0.0
        %763 = vmatprep.subr.mxu0 0.0
        %764 = vmatpush1.msra.mxu0 0.0
        %765 = vmatprep.subr.mxu0 0.0
        %766 = vmatpush1.msra.mxu0 0.0
        %767 = vmatprep.subr.mxu0 0.0
        %768 = vmatpush1.msra.mxu0 0.0
        %769 = vmatprep.subr.mxu0 0.0
        %770 = vmatpush1.msra.mxu0 0.0
        %771 = vmatprep.subr.mxu0 0.0
        %772 = vmatpush1.msra.mxu0 0.0
        %773 = vmatprep.subr.mxu0 0.0
        %774 = vmatpush1.msra.mxu0 0.0
        %775 = vmatprep.subr.mxu0 0.0
        %776 = vmatpush1.msra.mxu0 0.0
        %777 = vmatprep.subr.mxu0 0.0
        %778 = vmatpush1.msra.mxu0 0.0
        %779 = vmatprep.subr.mxu0 0.0
        %780 = vmatpush1.msra.mxu0 0.0
        %781 = vmatprep.subr.mxu0 0.0
        %782 = vmatpush1.msra.mxu0 0.0
        %783 = vmatprep.subr.mxu0 0.0
        %784 = vmatpush1.msra.mxu0 0.0
        %785 = vmatprep.subr.mxu0 0.0
        %786 = vmatpush1.msra.mxu0 0.0
        %787 = vmatprep.subr.mxu0 0.0
        %788 = vmatpush1.msra.mxu0 0.0
        %789 = vmatprep.subr.mxu0 0.0
        %790 = vmatpush1.msra.mxu0 0.0
        %791 = vmatprep.subr.mxu0 0.0
        %792 = vmatpush1.msra.mxu0 0.0
        %793 = vmatprep.subr.mxu0 0.0
        %794 = vmatpush1.msra.mxu0 0.0
        %795 = vmatprep.subr.mxu0 0.0
        %796 = vmatpush1.msra.mxu0 0.0
        %797 = vmatprep.subr.mxu0 0.0
        %798 = vmatpush1.msra.mxu0 0.0
        %799 = vmatprep.subr.mxu0 0.0
        %800 = vmatpush1.msra.mxu0 0.0
        %801 = vmatprep.subr.mxu0 0.0
        %802 = vmatpush1.msra.mxu0 0.0
        %803 = vmatprep.subr.mxu0 0.0
        %804 = vmatpush1.msra.mxu0 0.0
        %805 = vmatprep.subr.mxu0 0.0
        %806 = vmatpush1.msra.mxu0 0.0
        %807 = vmatprep.subr.mxu0 0.0
        %808 = vmatpush1.msra.mxu0 0.0
        %809 = vmatprep.mubr.f32.mxu0 0.0
        %810 = vmatmul.mubr.f32.gmra.mrb[0].mxu0 %v743
        %v811 = vpop.f32.mrb[0].mxu0
        %v812 = vadd.f32 %v739, %v811
        %v813 = vpop.f32.mrb[0].mxu0
        %814 = vdwg.mxu0
        %vm815 = vcmp.eq.f32.partialorder %v561, 0.0
        %v816 = vsel %vm815, -1e+30, 0.0
        %v818 = vlaneseq
        %v819 = vshrl.u32 %v818, 7
        %v820 = vsub.s32 0, %v819
        %v821 = vrot.slane %v816, %v820
        %vm823 = vcmask 64512
        %v825 = vsel %vm823, %v647, 0
        %v828 = vsel %vm823, %v729, 0
        %830 = vmatprep.subr.mxu0 0.0
        %831 = vmatpush1.xpose.msra.mxu0 %v828
        %832 = vmatprep.subr.mxu0 0.0
        %833 = vmatpush1.xpose.msra.mxu0 0.0
        %834 = vmatprep.subr.mxu0 0.0
        %835 = vmatpush1.xpose.msra.mxu0 0.0
        %836 = vmatprep.subr.mxu0 0.0
        %837 = vmatpush1.xpose.msra.mxu0 0.0
        %838 = vmatprep.subr.mxu0 0.0
        %839 = vmatpush1.xpose.msra.mxu0 0.0
        %840 = vmatprep.subr.mxu0 0.0
        %841 = vmatpush1.xpose.msra.mxu0 0.0
        %842 = vmatprep.subr.mxu0 0.0
        %843 = vmatpush1.xpose.msra.mxu0 0.0
        %844 = vmatprep.subr.mxu0 0.0
        %845 = vmatpush1.xpose.msra.mxu0 0.0
        %846 = vmatprep.subr.mxu0 0.0
        %847 = vmatpush1.xpose.msra.mxu0 0.0
        %848 = vmatprep.subr.mxu0 0.0
        %849 = vmatpush1.xpose.msra.mxu0 0.0
        %850 = vmatprep.subr.mxu0 0.0
        %851 = vmatpush1.xpose.msra.mxu0 0.0
        %852 = vmatprep.subr.mxu0 0.0
        %853 = vmatpush1.xpose.msra.mxu0 0.0
        %854 = vmatprep.subr.mxu0 0.0
        %855 = vmatpush1.xpose.msra.mxu0 0.0
        %856 = vmatprep.subr.mxu0 0.0
        %857 = vmatpush1.xpose.msra.mxu0 0.0
        %858 = vmatprep.subr.mxu0 0.0
        %859 = vmatpush1.xpose.msra.mxu0 0.0
        %860 = vmatprep.subr.mxu0 0.0
        %861 = vmatpush1.xpose.msra.mxu0 0.0
        %862 = vmatprep.subr.mxu0 0.0
        %863 = vmatpush1.xpose.msra.mxu0 0.0
        %864 = vmatprep.subr.mxu0 0.0
        %865 = vmatpush1.xpose.msra.mxu0 0.0
        %866 = vmatprep.subr.mxu0 0.0
        %867 = vmatpush1.xpose.msra.mxu0 0.0
        %868 = vmatprep.subr.mxu0 0.0
        %869 = vmatpush1.xpose.msra.mxu0 0.0
        %870 = vmatprep.subr.mxu0 0.0
        %871 = vmatpush1.xpose.msra.mxu0 0.0
        %872 = vmatprep.subr.mxu0 0.0
        %873 = vmatpush1.xpose.msra.mxu0 0.0
        %874 = vmatprep.subr.mxu0 0.0
        %875 = vmatpush1.xpose.msra.mxu0 0.0
        %876 = vmatprep.subr.mxu0 0.0
        %877 = vmatpush1.xpose.msra.mxu0 0.0
        %878 = vmatprep.subr.mxu0 0.0
        %879 = vmatpush1.xpose.msra.mxu0 0.0
        %880 = vmatprep.subr.mxu0 0.0
        %881 = vmatpush1.xpose.msra.mxu0 0.0
        %882 = vmatprep.subr.mxu0 0.0
        %883 = vmatpush1.xpose.msra.mxu0 0.0
        %884 = vmatprep.subr.mxu0 0.0
        %885 = vmatpush1.xpose.msra.mxu0 0.0
        %886 = vmatprep.subr.mxu0 0.0
        %887 = vmatpush1.xpose.msra.mxu0 0.0
        %888 = vmatprep.subr.mxu0 0.0
        %889 = vmatpush1.xpose.msra.mxu0 0.0
        %890 = vmatprep.subr.mxu0 0.0
        %891 = vmatpush1.xpose.msra.mxu0 0.0
        %892 = vmatprep.subr.mxu0 0.0
        %893 = vmatpush1.xpose.msra.mxu0 0.0
        %894 = vmatprep.mubr.f32.mxu0 0.0
        %895 = vmatmul.mubr.f32.gmra.mrb[0].mxu0 %v825
        %v896 = vpop.f32.mrb[0].mxu0
        %v897 = vadd.f32 %v821, %v896
        %v898 = vpop.f32.mrb[0].mxu0
        %899 = vdwg.mxu0
        %v900 = vsel %vm823, %v897, -inf
        %901 = vmax.xlane.f32.xlu0 %v900
        %v902 = vpop.xlane.xlu0 %901
        %v903 = vsub.f32 %v897, %v902
        %v904 = vmul.f32 %v903, 1.442695
        %v905 = vpow.pop %v904
        %v906 = vsel %vm823, %v905, 0.0
        %907 = vadd.xlane.f32.xlu0 %v906
        %v908 = vpop.xlane.xlu0 %907
        %v909 = vrcp.pop %v908
        %v910 = vmul.f32 %v905, %v909
        %v912 = vsel %vm823, %v910, 0
        %914 = vmatprep.subr.mxu0 0.0
        %915 = vmatpush1.msra.mxu0 %v812
        %916 = vmatprep.subr.mxu0 0.0
        %917 = vmatpush1.msra.mxu0 0.0
        %918 = vmatprep.subr.mxu0 0.0
        %919 = vmatpush1.msra.mxu0 0.0
        %920 = vmatprep.subr.mxu0 0.0
        %921 = vmatpush1.msra.mxu0 0.0
        %922 = vmatprep.subr.mxu0 0.0
        %923 = vmatpush1.msra.mxu0 0.0
        %924 = vmatprep.subr.mxu0 0.0
        %925 = vmatpush1.msra.mxu0 0.0
        %926 = vmatprep.subr.mxu0 0.0
        %927 = vmatpush1.msra.mxu0 0.0
        %928 = vmatprep.subr.mxu0 0.0
        %929 = vmatpush1.msra.mxu0 0.0
        %930 = vmatprep.subr.mxu0 0.0
        %931 = vmatpush1.msra.mxu0 0.0
        %932 = vmatprep.subr.mxu0 0.0
        %933 = vmatpush1.msra.mxu0 0.0
        %934 = vmatprep.subr.mxu0 0.0
        %935 = vmatpush1.msra.mxu0 0.0
        %936 = vmatprep.subr.mxu0 0.0
        %937 = vmatpush1.msra.mxu0 0.0
        %938 = vmatprep.subr.mxu0 0.0
        %939 = vmatpush1.msra.mxu0 0.0
        %940 = vmatprep.subr.mxu0 0.0
        %941 = vmatpush1.msra.mxu0 0.0
        %942 = vmatprep.subr.mxu0 0.0
        %943 = vmatpush1.msra.mxu0 0.0
        %944 = vmatprep.subr.mxu0 0.0
        %945 = vmatpush1.msra.mxu0 0.0
        %946 = vmatprep.subr.mxu0 0.0
        %947 = vmatpush1.msra.mxu0 0.0
        %948 = vmatprep.subr.mxu0 0.0
        %949 = vmatpush1.msra.mxu0 0.0
        %950 = vmatprep.subr.mxu0 0.0
        %951 = vmatpush1.msra.mxu0 0.0
        %952 = vmatprep.subr.mxu0 0.0
        %953 = vmatpush1.msra.mxu0 0.0
        %954 = vmatprep.subr.mxu0 0.0
        %955 = vmatpush1.msra.mxu0 0.0
        %956 = vmatprep.subr.mxu0 0.0
        %957 = vmatpush1.msra.mxu0 0.0
        %958 = vmatprep.subr.mxu0 0.0
        %959 = vmatpush1.msra.mxu0 0.0
        %960 = vmatprep.subr.mxu0 0.0
        %961 = vmatpush1.msra.mxu0 0.0
        %962 = vmatprep.subr.mxu0 0.0
        %963 = vmatpush1.msra.mxu0 0.0
        %964 = vmatprep.subr.mxu0 0.0
        %965 = vmatpush1.msra.mxu0 0.0
        %966 = vmatprep.subr.mxu0 0.0
        %967 = vmatpush1.msra.mxu0 0.0
        %968 = vmatprep.subr.mxu0 0.0
        %969 = vmatpush1.msra.mxu0 0.0
        %970 = vmatprep.subr.mxu0 0.0
        %971 = vmatpush1.msra.mxu0 0.0
        %972 = vmatprep.subr.mxu0 0.0
        %973 = vmatpush1.msra.mxu0 0.0
        %974 = vmatprep.subr.mxu0 0.0
        %975 = vmatpush1.msra.mxu0 0.0
        %976 = vmatprep.subr.mxu0 0.0
        %977 = vmatpush1.msra.mxu0 0.0
        %978 = vmatprep.mubr.f32.mxu0 0.0
        %979 = vmatmul.mubr.f32.gmra.mrb[0].mxu0 %v912
        %v980 = vpop.f32.mrb[0].mxu0
        %v981 = vadd.f32 0.0, %v980
        %v982 = vpop.f32.mrb[0].mxu0
        %983 = vdwg.mxu0
        %984 = vrot.lane.b32.xlu0 %v647, 120
        %v985 = vpop.permute.xlu0 %984
        %986 = vrot.lane.b32.xlu0 %v729, 120
        %v987 = vpop.permute.xlu0 %986
        %v988 = vsel %vm823, %v985, 0
        %v990 = vsel %vm823, %v987, 0
        %992 = vmatprep.subr.mxu0 0.0
        %993 = vmatpush1.xpose.msra.mxu0 %v990
        %994 = vmatprep.subr.mxu0 0.0
        %995 = vmatpush1.xpose.msra.mxu0 0.0
        %996 = vmatprep.subr.mxu0 0.0
        %997 = vmatpush1.xpose.msra.mxu0 0.0
        %998 = vmatprep.subr.mxu0 0.0
        %999 = vmatpush1.xpose.msra.mxu0 0.0
        %1000 = vmatprep.subr.mxu0 0.0
        %1001 = vmatpush1.xpose.msra.mxu0 0.0
        %1002 = vmatprep.subr.mxu0 0.0
        %1003 = vmatpush1.xpose.msra.mxu0 0.0
        %1004 = vmatprep.subr.mxu0 0.0
        %1005 = vmatpush1.xpose.msra.mxu0 0.0
        %1006 = vmatprep.subr.mxu0 0.0
        %1007 = vmatpush1.xpose.msra.mxu0 0.0
        %1008 = vmatprep.subr.mxu0 0.0
        %1009 = vmatpush1.xpose.msra.mxu0 0.0
        %1010 = vmatprep.subr.mxu0 0.0
        %1011 = vmatpush1.xpose.msra.mxu0 0.0
        %1012 = vmatprep.subr.mxu0 0.0
        %1013 = vmatpush1.xpose.msra.mxu0 0.0
        %1014 = vmatprep.subr.mxu0 0.0
        %1015 = vmatpush1.xpose.msra.mxu0 0.0
        %1016 = vmatprep.subr.mxu0 0.0
        %1017 = vmatpush1.xpose.msra.mxu0 0.0
        %1018 = vmatprep.subr.mxu0 0.0
        %1019 = vmatpush1.xpose.msra.mxu0 0.0
        %1020 = vmatprep.subr.mxu0 0.0
        %1021 = vmatpush1.xpose.msra.mxu0 0.0
        %1022 = vmatprep.subr.mxu0 0.0
        %1023 = vmatpush1.xpose.msra.mxu0 0.0
        %1024 = vmatprep.subr.mxu0 0.0
        %1025 = vmatpush1.xpose.msra.mxu0 0.0
        %1026 = vmatprep.subr.mxu0 0.0
        %1027 = vmatpush1.xpose.msra.mxu0 0.0
        %1028 = vmatprep.subr.mxu0 0.0
        %1029 = vmatpush1.xpose.msra.mxu0 0.0
        %1030 = vmatprep.subr.mxu0 0.0
        %1031 = vmatpush1.xpose.msra.mxu0 0.0
        %1032 = vmatprep.subr.mxu0 0.0
        %1033 = vmatpush1.xpose.msra.mxu0 0.0
        %1034 = vmatprep.subr.mxu0 0.0
        %1035 = vmatpush1.xpose.msra.mxu0 0.0
        %1036 = vmatprep.subr.mxu0 0.0
        %1037 = vmatpush1.xpose.msra.mxu0 0.0
        %1038 = vmatprep.subr.mxu0 0.0
        %1039 = vmatpush1.xpose.msra.mxu0 0.0
        %1040 = vmatprep.subr.mxu0 0.0
        %1041 = vmatpush1.xpose.msra.mxu0 0.0
        %1042 = vmatprep.subr.mxu0 0.0
        %1043 = vmatpush1.xpose.msra.mxu0 0.0
        %1044 = vmatprep.subr.mxu0 0.0
        %1045 = vmatpush1.xpose.msra.mxu0 0.0
        %1046 = vmatprep.subr.mxu0 0.0
        %1047 = vmatpush1.xpose.msra.mxu0 0.0
        %1048 = vmatprep.subr.mxu0 0.0
        %1049 = vmatpush1.xpose.msra.mxu0 0.0
        %1050 = vmatprep.subr.mxu0 0.0
        %1051 = vmatpush1.xpose.msra.mxu0 0.0
        %1052 = vmatprep.subr.mxu0 0.0
        %1053 = vmatpush1.xpose.msra.mxu0 0.0
        %1054 = vmatprep.subr.mxu0 0.0
        %1055 = vmatpush1.xpose.msra.mxu0 0.0
        %1056 = vmatprep.mubr.f32.mxu0 0.0
        %1057 = vmatmul.mubr.f32.gmra.mrb[0].mxu0 %v988
        %v1058 = vpop.f32.mrb[0].mxu0
        %v1059 = vadd.f32 %v821, %v1058
        %v1060 = vpop.f32.mrb[0].mxu0
        %1061 = vdwg.mxu0
        %v1062 = vsel %vm823, %v1059, -inf
        %1063 = vmax.xlane.f32.xlu0 %v1062
        %v1064 = vpop.xlane.xlu0 %1063
        %v1065 = vsub.f32 %v1059, %v1064
        %v1066 = vmul.f32 %v1065, 1.442695
        %v1067 = vpow.pop %v1066
        %v1068 = vsel %vm823, %v1067, 0.0
        %1069 = vadd.xlane.f32.xlu0 %v1068
        %v1070 = vpop.xlane.xlu0 %1069
        %v1071 = vrcp.pop %v1070
        %v1072 = vmul.f32 %v1067, %v1071
        %1074 = vrot.lane.b32.xlu0 %v812, 120
        %v1075 = vpop.permute.xlu0 %1074
        %v1078 = vsel %vm823, %v1072, 0
        %1080 = vmatprep.subr.mxu0 0.0
        %1081 = vmatpush1.msra.mxu0 %v1075
        %1082 = vmatprep.subr.mxu0 0.0
        %1083 = vmatpush1.msra.mxu0 0.0
        %1084 = vmatprep.subr.mxu0 0.0
        %1085 = vmatpush1.msra.mxu0 0.0
        %1086 = vmatprep.subr.mxu0 0.0
        %1087 = vmatpush1.msra.mxu0 0.0
        %1088 = vmatprep.subr.mxu0 0.0
        %1089 = vmatpush1.msra.mxu0 0.0
        %1090 = vmatprep.subr.mxu0 0.0
        %1091 = vmatpush1.msra.mxu0 0.0
        %1092 = vmatprep.subr.mxu0 0.0
        %1093 = vmatpush1.msra.mxu0 0.0
        %1094 = vmatprep.subr.mxu0 0.0
        %1095 = vmatpush1.msra.mxu0 0.0
        %1096 = vmatprep.subr.mxu0 0.0
        %1097 = vmatpush1.msra.mxu0 0.0
        %1098 = vmatprep.subr.mxu0 0.0
        %1099 = vmatpush1.msra.mxu0 0.0
        %1100 = vmatprep.subr.mxu0 0.0
        %1101 = vmatpush1.msra.mxu0 0.0
        %1102 = vmatprep.subr.mxu0 0.0
        %1103 = vmatpush1.msra.mxu0 0.0
        %1104 = vmatprep.subr.mxu0 0.0
        %1105 = vmatpush1.msra.mxu0 0.0
        %1106 = vmatprep.subr.mxu0 0.0
        %1107 = vmatpush1.msra.mxu0 0.0
        %1108 = vmatprep.subr.mxu0 0.0
        %1109 = vmatpush1.msra.mxu0 0.0
        %1110 = vmatprep.subr.mxu0 0.0
        %1111 = vmatpush1.msra.mxu0 0.0
        %1112 = vmatprep.subr.mxu0 0.0
        %1113 = vmatpush1.msra.mxu0 0.0
        %1114 = vmatprep.subr.mxu0 0.0
        %1115 = vmatpush1.msra.mxu0 0.0
        %1116 = vmatprep.subr.mxu0 0.0
        %1117 = vmatpush1.msra.mxu0 0.0
        %1118 = vmatprep.subr.mxu0 0.0
        %1119 = vmatpush1.msra.mxu0 0.0
        %1120 = vmatprep.subr.mxu0 0.0
        %1121 = vmatpush1.msra.mxu0 0.0
        %1122 = vmatprep.subr.mxu0 0.0
        %1123 = vmatpush1.msra.mxu0 0.0
        %1124 = vmatprep.subr.mxu0 0.0
        %1125 = vmatpush1.msra.mxu0 0.0
        %1126 = vmatprep.subr.mxu0 0.0
        %1127 = vmatpush1.msra.mxu0 0.0
        %1128 = vmatprep.subr.mxu0 0.0
        %1129 = vmatpush1.msra.mxu0 0.0
        %1130 = vmatprep.subr.mxu0 0.0
        %1131 = vmatpush1.msra.mxu0 0.0
        %1132 = vmatprep.subr.mxu0 0.0
        %1133 = vmatpush1.msra.mxu0 0.0
        %1134 = vmatprep.subr.mxu0 0.0
        %1135 = vmatpush1.msra.mxu0 0.0
        %1136 = vmatprep.subr.mxu0 0.0
        %1137 = vmatpush1.msra.mxu0 0.0
        %1138 = vmatprep.subr.mxu0 0.0
        %1139 = vmatpush1.msra.mxu0 0.0
        %1140 = vmatprep.subr.mxu0 0.0
        %1141 = vmatpush1.msra.mxu0 0.0
        %1142 = vmatprep.subr.mxu0 0.0
        %1143 = vmatpush1.msra.mxu0 0.0
        %1144 = vmatprep.mubr.f32.mxu0 0.0
        %1145 = vmatmul.mubr.f32.gmra.mrb[0].mxu0 %v1078
        %v1146 = vpop.f32.mrb[0].mxu0
        %v1147 = vadd.f32 0.0, %v1146
        %v1148 = vpop.f32.mrb[0].mxu0
        %1149 = vdwg.mxu0
        %1150 = vrot.lane.b32.xlu0 %v647, 112
        %v1151 = vpop.permute.xlu0 %1150
        %1152 = vrot.lane.b32.xlu0 %v729, 112
        %v1153 = vpop.permute.xlu0 %1152
        %v1154 = vsel %vm823, %v1151, 0
        %v1156 = vsel %vm823, %v1153, 0
        %1158 = vmatprep.subr.mxu0 0.0
        %1159 = vmatpush1.xpose.msra.mxu0 %v1156
        %1160 = vmatprep.subr.mxu0 0.0
        %1161 = vmatpush1.xpose.msra.mxu0 0.0
        %1162 = vmatprep.subr.mxu0 0.0
        %1163 = vmatpush1.xpose.msra.mxu0 0.0
        %1164 = vmatprep.subr.mxu0 0.0
        %1165 = vmatpush1.xpose.msra.mxu0 0.0
        %1166 = vmatprep.subr.mxu0 0.0
        %1167 = vmatpush1.xpose.msra.mxu0 0.0
        %1168 = vmatprep.subr.mxu0 0.0
        %1169 = vmatpush1.xpose.msra.mxu0 0.0
        %1170 = vmatprep.subr.mxu0 0.0
        %1171 = vmatpush1.xpose.msra.mxu0 0.0
        %1172 = vmatprep.subr.mxu0 0.0
        %1173 = vmatpush1.xpose.msra.mxu0 0.0
        %1174 = vmatprep.subr.mxu0 0.0
        %1175 = vmatpush1.xpose.msra.mxu0 0.0
        %1176 = vmatprep.subr.mxu0 0.0
        %1177 = vmatpush1.xpose.msra.mxu0 0.0
        %1178 = vmatprep.subr.mxu0 0.0
        %1179 = vmatpush1.xpose.msra.mxu0 0.0
        %1180 = vmatprep.subr.mxu0 0.0
        %1181 = vmatpush1.xpose.msra.mxu0 0.0
        %1182 = vmatprep.subr.mxu0 0.0
        %1183 = vmatpush1.xpose.msra.mxu0 0.0
        %1184 = vmatprep.subr.mxu0 0.0
        %1185 = vmatpush1.xpose.msra.mxu0 0.0
        %1186 = vmatprep.subr.mxu0 0.0
        %1187 = vmatpush1.xpose.msra.mxu0 0.0
        %1188 = vmatprep.subr.mxu0 0.0
        %1189 = vmatpush1.xpose.msra.mxu0 0.0
        %1190 = vmatprep.subr.mxu0 0.0
        %1191 = vmatpush1.xpose.msra.mxu0 0.0
        %1192 = vmatprep.subr.mxu0 0.0
        %1193 = vmatpush1.xpose.msra.mxu0 0.0
        %1194 = vmatprep.subr.mxu0 0.0
        %1195 = vmatpush1.xpose.msra.mxu0 0.0
        %1196 = vmatprep.subr.mxu0 0.0
        %1197 = vmatpush1.xpose.msra.mxu0 0.0
        %1198 = vmatprep.subr.mxu0 0.0
        %1199 = vmatpush1.xpose.msra.mxu0 0.0
        %1200 = vmatprep.subr.mxu0 0.0
        %1201 = vmatpush1.xpose.msra.mxu0 0.0
        %1202 = vmatprep.subr.mxu0 0.0
        %1203 = vmatpush1.xpose.msra.mxu0 0.0
        %1204 = vmatprep.subr.mxu0 0.0
        %1205 = vmatpush1.xpose.msra.mxu0 0.0
        %1206 = vmatprep.subr.mxu0 0.0
        %1207 = vmatpush1.xpose.msra.mxu0 0.0
        %1208 = vmatprep.subr.mxu0 0.0
        %1209 = vmatpush1.xpose.msra.mxu0 0.0
        %1210 = vmatprep.subr.mxu0 0.0
        %1211 = vmatpush1.xpose.msra.mxu0 0.0
        %1212 = vmatprep.subr.mxu0 0.0
        %1213 = vmatpush1.xpose.msra.mxu0 0.0
        %1214 = vmatprep.subr.mxu0 0.0
        %1215 = vmatpush1.xpose.msra.mxu0 0.0
        %1216 = vmatprep.subr.mxu0 0.0
        %1217 = vmatpush1.xpose.msra.mxu0 0.0
        %1218 = vmatprep.subr.mxu0 0.0
        %1219 = vmatpush1.xpose.msra.mxu0 0.0
        %1220 = vmatprep.subr.mxu0 0.0
        %1221 = vmatpush1.xpose.msra.mxu0 0.0
        %1222 = vmatprep.mubr.f32.mxu0 0.0
        %1223 = vmatmul.mubr.f32.gmra.mrb[0].mxu0 %v1154
        %v1224 = vpop.f32.mrb[0].mxu0
        %v1225 = vadd.f32 %v821, %v1224
        %v1226 = vpop.f32.mrb[0].mxu0
        %1227 = vdwg.mxu0
        %v1228 = vsel %vm823, %v1225, -inf
        %1229 = vmax.xlane.f32.xlu0 %v1228
        %v1230 = vpop.xlane.xlu0 %1229
        %v1231 = vsub.f32 %v1225, %v1230
        %v1232 = vmul.f32 %v1231, 1.442695
        %v1233 = vpow.pop %v1232
        %v1234 = vsel %vm823, %v1233, 0.0
        %1235 = vadd.xlane.f32.xlu0 %v1234
        %v1236 = vpop.xlane.xlu0 %1235
        %v1237 = vrcp.pop %v1236
        %v1238 = vmul.f32 %v1233, %v1237
        %1239 = vrot.lane.b32.xlu0 %v812, 112
        %v1240 = vpop.permute.xlu0 %1239
        %v1243 = vsel %vm823, %v1238, 0
        %1245 = vmatprep.subr.mxu0 0.0
        %1246 = vmatpush1.msra.mxu0 %v1240
        %1247 = vmatprep.subr.mxu0 0.0
        %1248 = vmatpush1.msra.mxu0 0.0
        %1249 = vmatprep.subr.mxu0 0.0
        %1250 = vmatpush1.msra.mxu0 0.0
        %1251 = vmatprep.subr.mxu0 0.0
        %1252 = vmatpush1.msra.mxu0 0.0
        %1253 = vmatprep.subr.mxu0 0.0
        %1254 = vmatpush1.msra.mxu0 0.0
        %1255 = vmatprep.subr.mxu0 0.0
        %1256 = vmatpush1.msra.mxu0 0.0
        %1257 = vmatprep.subr.mxu0 0.0
        %1258 = vmatpush1.msra.mxu0 0.0
        %1259 = vmatprep.subr.mxu0 0.0
        %1260 = vmatpush1.msra.mxu0 0.0
        %1261 = vmatprep.subr.mxu0 0.0
        %1262 = vmatpush1.msra.mxu0 0.0
        %1263 = vmatprep.subr.mxu0 0.0
        %1264 = vmatpush1.msra.mxu0 0.0
        %1265 = vmatprep.subr.mxu0 0.0
        %1266 = vmatpush1.msra.mxu0 0.0
        %1267 = vmatprep.subr.mxu0 0.0
        %1268 = vmatpush1.msra.mxu0 0.0
        %1269 = vmatprep.subr.mxu0 0.0
        %1270 = vmatpush1.msra.mxu0 0.0
        %1271 = vmatprep.subr.mxu0 0.0
        %1272 = vmatpush1.msra.mxu0 0.0
        %1273 = vmatprep.subr.mxu0 0.0
        %1274 = vmatpush1.msra.mxu0 0.0
        %1275 = vmatprep.subr.mxu0 0.0
        %1276 = vmatpush1.msra.mxu0 0.0
        %1277 = vmatprep.subr.mxu0 0.0
        %1278 = vmatpush1.msra.mxu0 0.0
        %1279 = vmatprep.subr.mxu0 0.0
        %1280 = vmatpush1.msra.mxu0 0.0
        %1281 = vmatprep.subr.mxu0 0.0
        %1282 = vmatpush1.msra.mxu0 0.0
        %1283 = vmatprep.subr.mxu0 0.0
        %1284 = vmatpush1.msra.mxu0 0.0
        %1285 = vmatprep.subr.mxu0 0.0
        %1286 = vmatpush1.msra.mxu0 0.0
        %1287 = vmatprep.subr.mxu0 0.0
        %1288 = vmatpush1.msra.mxu0 0.0
        %1289 = vmatprep.subr.mxu0 0.0
        %1290 = vmatpush1.msra.mxu0 0.0
        %1291 = vmatprep.subr.mxu0 0.0
        %1292 = vmatpush1.msra.mxu0 0.0
        %1293 = vmatprep.subr.mxu0 0.0
        %1294 = vmatpush1.msra.mxu0 0.0
        %1295 = vmatprep.subr.mxu0 0.0
        %1296 = vmatpush1.msra.mxu0 0.0
        %1297 = vmatprep.subr.mxu0 0.0
        %1298 = vmatpush1.msra.mxu0 0.0
        %1299 = vmatprep.subr.mxu0 0.0
        %1300 = vmatpush1.msra.mxu0 0.0
        %1301 = vmatprep.subr.mxu0 0.0
        %1302 = vmatpush1.msra.mxu0 0.0
        %1303 = vmatprep.subr.mxu0 0.0
        %1304 = vmatpush1.msra.mxu0 0.0
        %1305 = vmatprep.subr.mxu0 0.0
        %1306 = vmatpush1.msra.mxu0 0.0
        %1307 = vmatprep.subr.mxu0 0.0
        %1308 = vmatpush1.msra.mxu0 0.0
        %1309 = vmatprep.mubr.f32.mxu0 0.0
        %1310 = vmatmul.mubr.f32.gmra.mrb[0].mxu0 %v1243
        %v1311 = vpop.f32.mrb[0].mxu0
        %v1312 = vadd.f32 0.0, %v1311
        %v1313 = vpop.f32.mrb[0].mxu0
        %1314 = vdwg.mxu0
        %1315 = vrot.lane.b32.xlu0 %v647, 104
        %v1316 = vpop.permute.xlu0 %1315
        %1317 = vrot.lane.b32.xlu0 %v729, 104
        %v1318 = vpop.permute.xlu0 %1317
        %v1319 = vsel %vm823, %v1316, 0
        %v1321 = vsel %vm823, %v1318, 0
        %1323 = vmatprep.subr.mxu0 0.0
        %1324 = vmatpush1.xpose.msra.mxu0 %v1321
        %1325 = vmatprep.subr.mxu0 0.0
        %1326 = vmatpush1.xpose.msra.mxu0 0.0
        %1327 = vmatprep.subr.mxu0 0.0
        %1328 = vmatpush1.xpose.msra.mxu0 0.0
        %1329 = vmatprep.subr.mxu0 0.0
        %1330 = vmatpush1.xpose.msra.mxu0 0.0
        %1331 = vmatprep.subr.mxu0 0.0
        %1332 = vmatpush1.xpose.msra.mxu0 0.0
        %1333 = vmatprep.subr.mxu0 0.0
        %1334 = vmatpush1.xpose.msra.mxu0 0.0
        %1335 = vmatprep.subr.mxu0 0.0
        %1336 = vmatpush1.xpose.msra.mxu0 0.0
        %1337 = vmatprep.subr.mxu0 0.0
        %1338 = vmatpush1.xpose.msra.mxu0 0.0
        %1339 = vmatprep.subr.mxu0 0.0
        %1340 = vmatpush1.xpose.msra.mxu0 0.0
        %1341 = vmatprep.subr.mxu0 0.0
        %1342 = vmatpush1.xpose.msra.mxu0 0.0
        %1343 = vmatprep.subr.mxu0 0.0
        %1344 = vmatpush1.xpose.msra.mxu0 0.0
        %1345 = vmatprep.subr.mxu0 0.0
        %1346 = vmatpush1.xpose.msra.mxu0 0.0
        %1347 = vmatprep.subr.mxu0 0.0
        %1348 = vmatpush1.xpose.msra.mxu0 0.0
        %1349 = vmatprep.subr.mxu0 0.0
        %1350 = vmatpush1.xpose.msra.mxu0 0.0
        %1351 = vmatprep.subr.mxu0 0.0
        %1352 = vmatpush1.xpose.msra.mxu0 0.0
        %1353 = vmatprep.subr.mxu0 0.0
        %1354 = vmatpush1.xpose.msra.mxu0 0.0
        %1355 = vmatprep.subr.mxu0 0.0
        %1356 = vmatpush1.xpose.msra.mxu0 0.0
        %1357 = vmatprep.subr.mxu0 0.0
        %1358 = vmatpush1.xpose.msra.mxu0 0.0
        %1359 = vmatprep.subr.mxu0 0.0
        %1360 = vmatpush1.xpose.msra.mxu0 0.0
        %1361 = vmatprep.subr.mxu0 0.0
        %1362 = vmatpush1.xpose.msra.mxu0 0.0
        %1363 = vmatprep.subr.mxu0 0.0
        %1364 = vmatpush1.xpose.msra.mxu0 0.0
        %1365 = vmatprep.subr.mxu0 0.0
        %1366 = vmatpush1.xpose.msra.mxu0 0.0
        %1367 = vmatprep.subr.mxu0 0.0
        %1368 = vmatpush1.xpose.msra.mxu0 0.0
        %1369 = vmatprep.subr.mxu0 0.0
        %1370 = vmatpush1.xpose.msra.mxu0 0.0
        %1371 = vmatprep.subr.mxu0 0.0
        %1372 = vmatpush1.xpose.msra.mxu0 0.0
        %1373 = vmatprep.subr.mxu0 0.0
        %1374 = vmatpush1.xpose.msra.mxu0 0.0
        %1375 = vmatprep.subr.mxu0 0.0
        %1376 = vmatpush1.xpose.msra.mxu0 0.0
        %1377 = vmatprep.subr.mxu0 0.0
        %1378 = vmatpush1.xpose.msra.mxu0 0.0
        %1379 = vmatprep.subr.mxu0 0.0
        %1380 = vmatpush1.xpose.msra.mxu0 0.0
        %1381 = vmatprep.subr.mxu0 0.0
        %1382 = vmatpush1.xpose.msra.mxu0 0.0
        %1383 = vmatprep.subr.mxu0 0.0
        %1384 = vmatpush1.xpose.msra.mxu0 0.0
        %1385 = vmatprep.subr.mxu0 0.0
        %1386 = vmatpush1.xpose.msra.mxu0 0.0
        %1387 = vmatprep.mubr.f32.mxu0 0.0
        %1388 = vmatmul.mubr.f32.gmra.mrb[0].mxu0 %v1319
        %v1389 = vpop.f32.mrb[0].mxu0
        %v1390 = vadd.f32 %v821, %v1389
        %v1391 = vpop.f32.mrb[0].mxu0
        %1392 = vdwg.mxu0
        %v1393 = vsel %vm823, %v1390, -inf
        %1394 = vmax.xlane.f32.xlu0 %v1393
        %v1395 = vpop.xlane.xlu0 %1394
        %v1396 = vsub.f32 %v1390, %v1395
        %v1397 = vmul.f32 %v1396, 1.442695
        %v1398 = vpow.pop %v1397
        %v1399 = vsel %vm823, %v1398, 0.0
        %1400 = vadd.xlane.f32.xlu0 %v1399
        %v1401 = vpop.xlane.xlu0 %1400
        %v1402 = vrcp.pop %v1401
        %v1403 = vmul.f32 %v1398, %v1402
        %1404 = vrot.lane.b32.xlu0 %v812, 104
        %v1405 = vpop.permute.xlu0 %1404
        %v1408 = vsel %vm823, %v1403, 0
        %1410 = vmatprep.subr.mxu0 0.0
        %1411 = vmatpush1.msra.mxu0 %v1405
        %1412 = vmatprep.subr.mxu0 0.0
        %1413 = vmatpush1.msra.mxu0 0.0
        %1414 = vmatprep.subr.mxu0 0.0
        %1415 = vmatpush1.msra.mxu0 0.0
        %1416 = vmatprep.subr.mxu0 0.0
        %1417 = vmatpush1.msra.mxu0 0.0
        %1418 = vmatprep.subr.mxu0 0.0
        %1419 = vmatpush1.msra.mxu0 0.0
        %1420 = vmatprep.subr.mxu0 0.0
        %1421 = vmatpush1.msra.mxu0 0.0
        %1422 = vmatprep.subr.mxu0 0.0
        %1423 = vmatpush1.msra.mxu0 0.0
        %1424 = vmatprep.subr.mxu0 0.0
        %1425 = vmatpush1.msra.mxu0 0.0
        %1426 = vmatprep.subr.mxu0 0.0
        %1427 = vmatpush1.msra.mxu0 0.0
        %1428 = vmatprep.subr.mxu0 0.0
        %1429 = vmatpush1.msra.mxu0 0.0
        %1430 = vmatprep.subr.mxu0 0.0
        %1431 = vmatpush1.msra.mxu0 0.0
        %1432 = vmatprep.subr.mxu0 0.0
        %1433 = vmatpush1.msra.mxu0 0.0
        %1434 = vmatprep.subr.mxu0 0.0
        %1435 = vmatpush1.msra.mxu0 0.0
        %1436 = vmatprep.subr.mxu0 0.0
        %1437 = vmatpush1.msra.mxu0 0.0
        %1438 = vmatprep.subr.mxu0 0.0
        %1439 = vmatpush1.msra.mxu0 0.0
        %1440 = vmatprep.subr.mxu0 0.0
        %1441 = vmatpush1.msra.mxu0 0.0
        %1442 = vmatprep.subr.mxu0 0.0
        %1443 = vmatpush1.msra.mxu0 0.0
        %1444 = vmatprep.subr.mxu0 0.0
        %1445 = vmatpush1.msra.mxu0 0.0
        %1446 = vmatprep.subr.mxu0 0.0
        %1447 = vmatpush1.msra.mxu0 0.0
        %1448 = vmatprep.subr.mxu0 0.0
        %1449 = vmatpush1.msra.mxu0 0.0
        %1450 = vmatprep.subr.mxu0 0.0
        %1451 = vmatpush1.msra.mxu0 0.0
        %1452 = vmatprep.subr.mxu0 0.0
        %1453 = vmatpush1.msra.mxu0 0.0
        %1454 = vmatprep.subr.mxu0 0.0
        %1455 = vmatpush1.msra.mxu0 0.0
        %1456 = vmatprep.subr.mxu0 0.0
        %1457 = vmatpush1.msra.mxu0 0.0
        %1458 = vmatprep.subr.mxu0 0.0
        %1459 = vmatpush1.msra.mxu0 0.0
        %1460 = vmatprep.subr.mxu0 0.0
        %1461 = vmatpush1.msra.mxu0 0.0
        %1462 = vmatprep.subr.mxu0 0.0
        %1463 = vmatpush1.msra.mxu0 0.0
        %1464 = vmatprep.subr.mxu0 0.0
        %1465 = vmatpush1.msra.mxu0 0.0
        %1466 = vmatprep.subr.mxu0 0.0
        %1467 = vmatpush1.msra.mxu0 0.0
        %1468 = vmatprep.subr.mxu0 0.0
        %1469 = vmatpush1.msra.mxu0 0.0
        %1470 = vmatprep.subr.mxu0 0.0
        %1471 = vmatpush1.msra.mxu0 0.0
        %1472 = vmatprep.subr.mxu0 0.0
        %1473 = vmatpush1.msra.mxu0 0.0
        %1474 = vmatprep.mubr.f32.mxu0 0.0
        %1475 = vmatmul.mubr.f32.gmra.mrb[0].mxu0 %v1408
        %v1476 = vpop.f32.mrb[0].mxu0
        %v1477 = vadd.f32 0.0, %v1476
        %v1478 = vpop.f32.mrb[0].mxu0
        %1479 = vdwg.mxu0
        %1481 = vrot.lane.b32.xlu0 %v1147, 8
        %v1482 = vpop.permute.xlu0 %1481
        %1485 = vrot.lane.b32.xlu0 %v1312, 16
        %v1486 = vpop.permute.xlu0 %1485
        %1489 = vrot.lane.b32.xlu0 %v1477, 24
        %v1490 = vpop.permute.xlu0 %1489
        %v1492 = vsel %vm823, %v981, %v1482
        %v1493 = vsel %vm741, %v1492, %v1486
        %v1494 = vsel %vm658, %v1493, %v1490
        %v1495 = vld [vmem:[%s10] sm:$0xff]
        %v1496 = vld [vmem:[%s10 + $0x8] sm:$0xff]
        %v1497 = vld [vmem:[%s10 + $0x10] sm:$0xff]
        %v1498 = vld [vmem:[%s10 + $0x18] sm:$0xff]
        %v1499 = vld [vmem:[%s11] sm:$0x1]
        %v1501 = vlaneseq
        %v1502 = vshrl.u32 %v1501, 7
        %v1503 = vsub.s32 0, %v1502
        %v1504 = vrot.slane %v1499, %v1503
        %v1507 = vsel %vm573, %v1494, 0
        %1509 = vmatprep.subr.mxu0 0.0
        %1510 = vmatpush1.msra.mxu0 %v1495
        %1511 = vmatprep.subr.mxu0 0.0
        %1512 = vmatpush1.msra.mxu0 %v1496
        %1513 = vmatprep.subr.mxu0 0.0
        %1514 = vmatpush1.msra.mxu0 %v1497
        %1515 = vmatprep.subr.mxu0 0.0
        %1516 = vmatpush1.msra.mxu0 %v1498
        %1517 = vmatprep.subr.mxu0 0.0
        %1518 = vmatpush1.msra.mxu0 0.0
        %1519 = vmatprep.subr.mxu0 0.0
        %1520 = vmatpush1.msra.mxu0 0.0
        %1521 = vmatprep.subr.mxu0 0.0
        %1522 = vmatpush1.msra.mxu0 0.0
        %1523 = vmatprep.subr.mxu0 0.0
        %1524 = vmatpush1.msra.mxu0 0.0
        %1525 = vmatprep.subr.mxu0 0.0
        %1526 = vmatpush1.msra.mxu0 0.0
        %1527 = vmatprep.subr.mxu0 0.0
        %1528 = vmatpush1.msra.mxu0 0.0
        %1529 = vmatprep.subr.mxu0 0.0
        %1530 = vmatpush1.msra.mxu0 0.0
        %1531 = vmatprep.subr.mxu0 0.0
        %1532 = vmatpush1.msra.mxu0 0.0
        %1533 = vmatprep.subr.mxu0 0.0
        %1534 = vmatpush1.msra.mxu0 0.0
        %1535 = vmatprep.subr.mxu0 0.0
        %1536 = vmatpush1.msra.mxu0 0.0
        %1537 = vmatprep.subr.mxu0 0.0
        %1538 = vmatpush1.msra.mxu0 0.0
        %1539 = vmatprep.subr.mxu0 0.0
        %1540 = vmatpush1.msra.mxu0 0.0
        %1541 = vmatprep.subr.mxu0 0.0
        %1542 = vmatpush1.msra.mxu0 0.0
        %1543 = vmatprep.subr.mxu0 0.0
        %1544 = vmatpush1.msra.mxu0 0.0
        %1545 = vmatprep.subr.mxu0 0.0
        %1546 = vmatpush1.msra.mxu0 0.0
        %1547 = vmatprep.subr.mxu0 0.0
        %1548 = vmatpush1.msra.mxu0 0.0
        %1549 = vmatprep.subr.mxu0 0.0
        %1550 = vmatpush1.msra.mxu0 0.0
        %1551 = vmatprep.subr.mxu0 0.0
        %1552 = vmatpush1.msra.mxu0 0.0
        %1553 = vmatprep.subr.mxu0 0.0
        %1554 = vmatpush1.msra.mxu0 0.0
        %1555 = vmatprep.subr.mxu0 0.0
        %1556 = vmatpush1.msra.mxu0 0.0
        %1557 = vmatprep.subr.mxu0 0.0
        %1558 = vmatpush1.msra.mxu0 0.0
        %1559 = vmatprep.subr.mxu0 0.0
        %1560 = vmatpush1.msra.mxu0 0.0
        %1561 = vmatprep.subr.mxu0 0.0
        %1562 = vmatpush1.msra.mxu0 0.0
        %1563 = vmatprep.subr.mxu0 0.0
        %1564 = vmatpush1.msra.mxu0 0.0
        %1565 = vmatprep.subr.mxu0 0.0
        %1566 = vmatpush1.msra.mxu0 0.0
        %1567 = vmatprep.subr.mxu0 0.0
        %1568 = vmatpush1.msra.mxu0 0.0
        %1569 = vmatprep.subr.mxu0 0.0
        %1570 = vmatpush1.msra.mxu0 0.0
        %1571 = vmatprep.subr.mxu0 0.0
        %1572 = vmatpush1.msra.mxu0 0.0
        %1573 = vmatprep.mubr.f32.mxu0 0.0
        %1574 = vmatmul.mubr.f32.gmra.mrb[0].mxu0 %v1507
        %v1575 = vpop.f32.mrb[0].mxu0
        %v1576 = vadd.f32 %v1504, %v1575
        %v1577 = vpop.f32.mrb[0].mxu0
        %1578 = vdwg.mxu0
        %1579 = vst.msk [vmem:[%s554] sm:$0xff] %vm573, %v1576
        %s1580 = sand.u32 %s314, 1
        %s1581 = scalar_lea.sflag [#allocation4], %s1580
        %s1582 = sand.u32 %s314, 1
        %s1583 = smul.addr %s1582, 8
        %s1584 = scalar_lea.vmem [#allocation13], %s1583
        // Predicated region
        $region93: #{tpu_custom_call.1} parent=67 // pred_check
          %p1585 = pneg %p324
        $region94: #{tpu_custom_call.1} parent=67 // pred_check_branch
          %1587 = sbr.rel (%p1585) target = $region96
        $region95: #{tpu_custom_call.1} parent=67 // pred_region
          %s1589 = ssub.s32 128, 128
          %1590 = vsyncadd %s1581, %s1589
          %s1591 = smul.addr %s34, 128
          %s1592 = scalar_lea.hbm %s12, %s1591
          %s1594 = sshll.u32 %s1584, 4
          %s1595 = int_to_ptr.vmem [resolvable:$true] %s1594
          %1597 = dma.vmem_to_hbm [thread:$0]  %s1595, 128, %s1592, %s1581
        $region96: #{tpu_custom_call.1} parent=67 // pred_fallthru
          _
      $region68: #{tpu_custom_call.1} parent=5 // pred_fallthru
        _
      %p1598 = scmp.le.s32.totalorder 2, %s29
      // Predicated region
      $region97: #{tpu_custom_call.1} parent=5 // pred_check
        %p1599 = pneg %p1598
      $region98: #{tpu_custom_call.1} parent=5 // pred_check_branch
        %1601 = sbr.rel (%p1599) target = $region100
      $region99: #{tpu_custom_call.1} parent=5 // pred_region
        %s1602 = ssub.s32 %s29, 2
        // Predicated region
        $region101: #{tpu_custom_call.1} parent=99 // pred_check
          %p1603 = pneg %p330
        $region102: #{tpu_custom_call.1} parent=99 // pred_check_branch
          %1605 = sbr.rel (%p1603) target = $region104
        $region103: #{tpu_custom_call.1} parent=99 // pred_region
          %s1606 = sand.u32 %s315, 1
          %s1607 = scalar_lea.sflag [#allocation4], %s1606
          %s1608 = sand.u32 %s315, 1
          %s1609 = smul.addr %s1608, 8
          %s1610 = scalar_lea.vmem [#allocation13], %s1609
          %1611 = dma.done %s1607, 128
        $region104: #{tpu_custom_call.1} parent=99 // pred_fallthru
          _
      $region100: #{tpu_custom_call.1} parent=5 // pred_fallthru
        _
    $region6: #{tpu_custom_call.1} parent=1 // loop_footer
      %s33 = sadd.s32 1, %s29
    $region7: #{tpu_custom_call.1} parent=1 // loop_footer_branch
      %28 = sbr.rel target = $region3
    $region8: #{tpu_custom_call.1} parent=1 // loop_exit
      _
    %1612 = vsyncpa [#allocation3], 1
    %s1613 = scalar_lea.sflag [#allocation3], 1
    %1614 = vsyncpa %s1613, 1
    %1615 = vsyncpa [#allocation6], 1
    %s1616 = scalar_lea.sflag [#allocation6], 1
    %1617 = vsyncpa %s1616, 1
    %1618 = vsyncpa [#allocation9], 1
    %1619 = vsyncpa [#allocation12], 1
    %1620 = vsyncpa [#allocation4], 1
    %s1621 = scalar_lea.sflag [#allocation4], 1
    %1622 = vsyncpa %s1621, 1

</llo_original>
